<compile_context>
chip_gen: v7x
topology: tpu7x:2x2x1
jax: 0.10.0
libtpu: 0.0.40
codegen_flags: <defaults>
</compile_context>

<pallas_src>
import functools

import jax
import jax.numpy as jnp
from jax.experimental import pallas as pl
from jax.experimental.pallas import tpu as pltpu


# ---------------------------------------------------------------------------
# Kernels
# ---------------------------------------------------------------------------

def _ffn_resident_kernel(x_ref, w1_ref, b1_ref, w2_ref, b2_ref, o_ref,
                         *, compute_dtype):
    """Weights fully resident: one row tile per grid step, tf == F."""
    x = x_ref[...]                                    # (tm, D), original dtype
    xc = x.astype(compute_dtype)                      # bf16 operand for MXU
    h = jnp.dot(xc, w1_ref[...], preferred_element_type=jnp.float32)
    h = jnp.maximum(h + b1_ref[...], 0.0)             # bias + ReLU in f32
    out = jnp.dot(h.astype(compute_dtype), w2_ref[...],
                  preferred_element_type=jnp.float32)
    # Residual add (dropout p=0.0 is a no-op).
    o_ref[...] = (x.astype(jnp.float32) + out + b2_ref[...]).astype(o_ref.dtype)


def _ffn_stream_kernel(x_ref, w1_ref, b1_ref, w2_ref, b2_ref, o_ref,
                       acc_ref, xc_ref, *, compute_dtype):
    """F streamed in chunks (grid axis 1, 'arbitrary') with f32 accumulator."""
    f = pl.program_id(1)

    @pl.when(f == 0)
    def _():
        x = x_ref[...]
        # Hoisted cast: reused by every F chunk of this row tile.
        xc_ref[...] = x.astype(compute_dtype)
        # Fold residual + second bias into the accumulator init.
        acc_ref[...] = x.astype(jnp.float32) + b2_ref[...]

    # Linear 1 (F-chunk) + bias + ReLU, f32 accumulation.
    h = jnp.dot(xc_ref[...], w1_ref[...], preferred_element_type=jnp.float32)
    h = jnp.maximum(h + b1_ref[...], 0.0)              # (tm, tf)

    # Linear 2 partial product over this F-chunk, accumulated in f32.
    acc_ref[...] += jnp.dot(h.astype(compute_dtype), w2_ref[...],
                            preferred_element_type=jnp.float32)

    @pl.when(f == pl.num_programs(1) - 1)
    def _():
        o_ref[...] = acc_ref[...].astype(o_ref.dtype)


# ---------------------------------------------------------------------------
# Planning helpers
# ---------------------------------------------------------------------------

def _cdiv(a, b):
    return -(-a // b)


def _round_up(n, m):
    return ((n + m - 1) // m) * m


def _vmem_budget_bytes():
    """Usable VMEM budget for this generation (leaves Mosaic headroom)."""
    cap = 64 * 1024 * 1024                       # conservative default (v7x)
    try:
        info = pltpu.get_tpu_info()
        cap = int(getattr(info, "vmem_capacity_bytes", cap)) or cap
    except Exception:
        pass
    budget = min(cap - 8 * 1024 * 1024, int(cap * 0.8))
    return max(budget, 24 * 1024 * 1024), cap


def _resident_vmem_bytes(tm, D, F, in_bytes, cd_bytes):
    return (4 * tm * D * in_bytes            # x + out tiles, double-buffered
            + 4 * D * F * cd_bytes           # W1 + W2, double-buffered
            + 2 * (F + D) * 4                # biases
            + tm * F * (4 + cd_bytes)        # hidden f32 + bf16 temporaries
            + tm * D * 4)                    # f32 x / output temporaries


def _stream_vmem_bytes(tm, tf, D, in_bytes, cd_bytes):
    return (4 * tm * D * in_bytes            # x + out tiles, double-buffered
            + 4 * D * tf * cd_bytes          # W1 chunk + W2 chunk, double-buffered
            + 2 * (tf + D) * 4               # biases
            + tm * D * 4                     # f32 accumulator scratch
            + tm * D * cd_bytes              # bf16 x scratch
            + tm * tf * (4 + cd_bytes))      # hidden-chunk temporaries


def _plan_tiles(M, D, F, in_bytes, cd_bytes, tile_m, budget):
    """Pick (tm, tf).  tf=None means weights-resident (no F streaming)."""
    n_tiles = max(1, _cdiv(M, tile_m))
    if n_tiles == 1 and M >= 256:
        n_tiles = 2                                   # feed both v7x TensorCores
    tm = _round_up(_cdiv(M, n_tiles), 16)             # adaptive: minimal padding

    while True:
        if _resident_vmem_bytes(tm, D, F, in_bytes, cd_bytes) <= budget:
            return tm, None
        for tf in (2048, 1024, 512, 256, 128):
            if tf <= _round_up(F, 128) and \
               _stream_vmem_bytes(tm, tf, D, in_bytes, cd_bytes) <= budget:
                return tm, tf
        if tm <= 64:
            # TODO(synk): for extreme D even the smallest tiles exceed the VMEM
            # estimate; fall back to the minimal streaming config.
            return tm, 128
        tm = _round_up(tm // 2, 16)


# ---------------------------------------------------------------------------
# Public wrapper
# ---------------------------------------------------------------------------

@functools.partial(jax.jit, static_argnames=("tile_m", "compute_dtype"))
def ffn_pallas(x, w1, b1, w2, b2, *, tile_m=512, compute_dtype=jnp.bfloat16):
    """x: (..., D). w1: (D, F), b1: (F,), w2: (F, D), b2: (D,)."""
    orig_shape = x.shape
    D = orig_shape[-1]
    F = w1.shape[1]
    x2d = x.reshape(-1, D)
    M = x2d.shape[0]

    in_bytes = jnp.dtype(x.dtype).itemsize
    cd_bytes = jnp.dtype(compute_dtype).itemsize

    budget, _vmem_cap = _vmem_budget_bytes()
    tm, tf = _plan_tiles(M, D, F, in_bytes, cd_bytes, tile_m, budget)

    M_pad = _round_up(M, tm)
    if M_pad != M:
        x2d = jnp.pad(x2d, ((0, M_pad - M), (0, 0)))
    num_i = M_pad // tm

    # bf16 weights for the MXU; biases stay f32 (added post-accumulation).
    w1c = w1.astype(compute_dtype)
    w2c = w2.astype(compute_dtype)
    b1_2d = b1.reshape(1, F).astype(jnp.float32)
    b2_2d = b2.reshape(1, D).astype(jnp.float32)

    if tf is None:
        # -------- weights-resident fast path: weights fetched once --------
        vmem_est = _resident_vmem_bytes(tm, D, F, in_bytes, cd_bytes)
        cost = pl.CostEstimate(
            flops=4 * M_pad * D * F,
            transcendentals=0,
            bytes_accessed=(2 * M_pad * D * in_bytes
                            + 2 * D * F * cd_bytes
                            + (F + D) * 4))
        kernel = functools.partial(_ffn_resident_kernel,
                                   compute_dtype=compute_dtype)
        grid_spec = pltpu.PrefetchScalarGridSpec(
            num_scalar_prefetch=0,
            grid=(num_i,),
            in_specs=[
                pl.BlockSpec((tm, D), lambda i: (i, 0)),   # x rows
                pl.BlockSpec((D, F), lambda i: (0, 0)),    # W1 (constant index)
                pl.BlockSpec((1, F), lambda i: (0, 0)),    # b1
                pl.BlockSpec((F, D), lambda i: (0, 0)),    # W2 (constant index)
                pl.BlockSpec((1, D), lambda i: (0, 0)),    # b2
            ],
            out_specs=pl.BlockSpec((tm, D), lambda i: (i, 0)),
        )
        dim_sem = ("parallel",)
    else:
        # ---------------- F-streaming path with f32 accumulator -----------
        F_pad = _round_up(F, tf)
        if F_pad != F:
            # Zero-padded hidden columns: ReLU(0 + 0) @ 0-rows contributes 0.
            w1c = jnp.pad(w1c, ((0, 0), (0, F_pad - F)))
            w2c = jnp.pad(w2c, ((0, F_pad - F), (0, 0)))
            b1_2d = jnp.pad(b1_2d, ((0, 0), (0, F_pad - F)))
        vmem_est = _stream_vmem_bytes(tm, tf, D, in_bytes, cd_bytes)
        cost = pl.CostEstimate(
            flops=4 * M_pad * D * F_pad,
            transcendentals=0,
            bytes_accessed=(2 * M_pad * D * in_bytes
                            + num_i * 2 * D * F_pad * cd_bytes
                            + num_i * (F_pad + D) * 4))
        kernel = functools.partial(_ffn_stream_kernel,
                                   compute_dtype=compute_dtype)
        grid_spec = pltpu.PrefetchScalarGridSpec(
            num_scalar_prefetch=0,
            grid=(num_i, F_pad // tf),
            in_specs=[
                pl.BlockSpec((tm, D), lambda i, f: (i, 0)),   # x rows (resident over f)
                pl.BlockSpec((D, tf), lambda i, f: (0, f)),   # W1 column chunk
                pl.BlockSpec((1, tf), lambda i, f: (0, f)),   # b1 chunk
                pl.BlockSpec((tf, D), lambda i, f: (f, 0)),   # W2 row chunk
                pl.BlockSpec((1, D), lambda i, f: (0, 0)),    # b2
            ],
            out_specs=pl.BlockSpec((tm, D), lambda i, f: (i, 0)),
            scratch_shapes=[pltpu.VMEM((tm, D), jnp.float32),     # accumulator
                            pltpu.VMEM((tm, D), compute_dtype)],  # hoisted x cast
        )
        dim_sem = ("parallel", "arbitrary")

    vmem_limit = min(max(int(1.5 * vmem_est), 32 * 1024 * 1024), budget)

    out2d = pl.pallas_call(
        kernel,
        out_shape=jax.ShapeDtypeStruct((M_pad, D), x.dtype),
        grid_spec=grid_spec,
        compiler_params=pltpu.CompilerParams(
            dimension_semantics=dim_sem,
            vmem_limit_bytes=int(vmem_limit)),
        cost_estimate=cost,
    )(x2d, w1c, b1_2d, w2c, b2_2d)

    if M_pad != M:
        out2d = out2d[:M]
    return out2d.reshape(orig_shape)


# ---------------------------------------------------------------------------
# Reference + test harness
# ---------------------------------------------------------------------------

def init_ffn_params(key, embed_dims, feedforward_channels, dtype=jnp.float32):
    """Deterministic init matching nn.Linear shapes (weights pre-transposed)."""
    k1, k2, k3, k4 = jax.random.split(key, 4)
    lim1 = 1.0 / (embed_dims ** 0.5)
    lim2 = 1.0 / (feedforward_channels ** 0.5)
    w1 = jax.random.uniform(k1, (embed_dims, feedforward_channels),
                            dtype, -lim1, lim1)
    b1 = jax.random.uniform(k2, (feedforward_channels,), dtype, -lim1, lim1)
    w2 = jax.random.uniform(k3, (feedforward_channels, embed_dims),
                            dtype, -lim2, lim2)
    b2 = jax.random.uniform(k4, (embed_dims,), dtype, -lim2, lim2)
    return w1, b1, w2, b2


def ffn_reference_f32(x, w1, b1, w2, b2):
    h = jnp.maximum(x @ w1 + b1, 0.0)
    return x + (h @ w2 + b2)


def ffn_reference_bf16(x, w1, b1, w2, b2, compute_dtype=jnp.bfloat16):
    """Emulates the kernel's bf16-operand / f32-accumulate numerics."""
    h = jnp.dot(x.astype(compute_dtype), w1.astype(compute_dtype),
                preferred_element_type=jnp.float32) + b1.astype(jnp.float32)
    h = jnp.maximum(h, 0.0)
    out = jnp.dot(h.astype(compute_dtype), w2.astype(compute_dtype),
                  preferred_element_type=jnp.float32) + b2.astype(jnp.float32)
    return x.astype(jnp.float32) + out


if __name__ == "__main__":
    # Small shapes consistent with the module defaults: (batch, seq, embed_dims)
    batch, seq = 2, 8
    embed_dims, feedforward_channels = 256, 1024

    key = jax.random.PRNGKey(0)
    kx, kp = jax.random.split(key)
    x = jax.random.normal(kx, (batch, seq, embed_dims), jnp.float32)
    w1, b1, w2, b2 = init_ffn_params(kp, embed_dims, feedforward_channels)

    out = ffn_pallas(x, w1, b1, w2, b2)
    jax.block_until_ready(out)
    assert out.shape == x.shape

    # Tight check against a bf16-operand/f32-accumulate reference.
    ref_bf16 = ffn_reference_bf16(x, w1, b1, w2, b2)
    assert jnp.allclose(out.astype(jnp.float32), ref_bf16, atol=2e-3, rtol=2e-3)

    # Loose sanity check against the full-f32 reference.
    ref_f32 = ffn_reference_f32(x, w1, b1, w2, b2)
    assert jnp.allclose(out.astype(jnp.float32), ref_f32, atol=5e-2, rtol=5e-2)

    # Also exercise a larger / ragged-M shape that takes the multi-tile path.
    x2 = jax.random.normal(kx, (3, 271, embed_dims), jnp.float32)
    out2 = ffn_pallas(x2, w1, b1, w2, b2)
    jax.block_until_ready(out2)
    assert out2.shape == x2.shape
    ref2 = ffn_reference_bf16(x2, w1, b1, w2, b2)
    assert jnp.allclose(out2.astype(jnp.float32), ref2, atol=2e-3, rtol=2e-3)

    print("KERNEL_OK")
</pallas_src>

<mosaic_0001>
module attributes {stable_mosaic.version = 11 : i64} {
  func.func @_ffn_resident_kernel(%arg0: i32, %arg1: memref<16x256xf32, #tpu.memory_space<vmem>>, %arg2: memref<256x1024xbf16, #tpu.memory_space<vmem>>, %arg3: memref<1x1024xf32, #tpu.memory_space<vmem>>, %arg4: memref<1024x256xbf16, #tpu.memory_space<vmem>>, %arg5: memref<1x256xf32, #tpu.memory_space<vmem>>, %arg6: memref<16x256xf32, #tpu.memory_space<vmem>>) attributes {dimension_semantics = [#tpu.dimension_semantics<parallel>], iteration_bounds = array<i64: 1>, scalar_prefetch = 0 : i64, scratch_operands = 0 : i64, tpu.core_type = #tpu.core_type<tc>, window_params = [{transform_indices = @transform_0, window_bounds = array<i64: 16, 256>}, {pipeline_mode = #tpu.pipeline_mode<synchronous>, transform_indices = @transform_1, window_bounds = array<i64: 256, 1024>}, {pipeline_mode = #tpu.pipeline_mode<synchronous>, transform_indices = @transform_2, window_bounds = array<i64: 1, 1024>}, {pipeline_mode = #tpu.pipeline_mode<synchronous>, transform_indices = @transform_3, window_bounds = array<i64: 1024, 256>}, {pipeline_mode = #tpu.pipeline_mode<synchronous>, transform_indices = @transform_4, window_bounds = array<i64: 1, 256>}, {transform_indices = @transform_5, window_bounds = array<i64: 16, 256>}]} {
    %c0 = arith.constant 0 : index
    %c0_0 = arith.constant 0 : index
    %0 = vector.load %arg1[%c0, %c0_0] : memref<16x256xf32, #tpu.memory_space<vmem>>, vector<16x256xf32>
    %1 = arith.truncf %0 : vector<16x256xf32> to vector<16x256xbf16>
    %c0_1 = arith.constant 0 : index
    %c0_2 = arith.constant 0 : index
    %2 = vector.load %arg2[%c0_1, %c0_2] : memref<256x1024xbf16, #tpu.memory_space<vmem>>, vector<256x1024xbf16>
    %cst = arith.constant dense<0.000000e+00> : vector<16x1024xf32>
    %3 = tpu.matmul %1, %2, %cst {dimension_numbers = #tpu.dot_dimension_numbers<[1], [0], [0], [1], [0, 0, 1, 1], [], []>} : vector<16x256xbf16>, vector<256x1024xbf16>, vector<16x1024xf32> -> vector<16x1024xf32>
    %c0_3 = arith.constant 0 : index
    %c0_4 = arith.constant 0 : index
    %4 = vector.load %arg3[%c0_3, %c0_4] : memref<1x1024xf32, #tpu.memory_space<vmem>>, vector<1x1024xf32>
    %5 = vector.broadcast %4 : vector<1x1024xf32> to vector<16x1024xf32>
    %6 = arith.addf %3, %5 : vector<16x1024xf32>
    %cst_5 = arith.constant 0.000000e+00 : f32
    %7 = vector.broadcast %cst_5 : f32 to vector<16x1024xf32>
    %8 = arith.maximumf %6, %7 : vector<16x1024xf32>
    %9 = arith.truncf %8 : vector<16x1024xf32> to vector<16x1024xbf16>
    %c0_6 = arith.constant 0 : index
    %c0_7 = arith.constant 0 : index
    %10 = vector.load %arg4[%c0_6, %c0_7] : memref<1024x256xbf16, #tpu.memory_space<vmem>>, vector<1024x256xbf16>
    %cst_8 = arith.constant dense<0.000000e+00> : vector<16x256xf32>
    %11 = tpu.matmul %9, %10, %cst_8 {dimension_numbers = #tpu.dot_dimension_numbers<[1], [0], [0], [1], [0, 0, 1, 1], [], []>} : vector<16x1024xbf16>, vector<1024x256xbf16>, vector<16x256xf32> -> vector<16x256xf32>
    %12 = arith.addf %0, %11 : vector<16x256xf32>
    %c0_9 = arith.constant 0 : index
    %c0_10 = arith.constant 0 : index
    %13 = vector.load %arg5[%c0_9, %c0_10] : memref<1x256xf32, #tpu.memory_space<vmem>>, vector<1x256xf32>
    %14 = vector.broadcast %13 : vector<1x256xf32> to vector<16x256xf32>
    %15 = arith.addf %12, %14 : vector<16x256xf32>
    %c0_11 = arith.constant 0 : index
    %c0_12 = arith.constant 0 : index
    %16 = vector.load %arg6[%c0_11, %c0_12] : memref<16x256xf32, #tpu.memory_space<vmem>>, vector<16x256xf32>
    tpu.vector_store %arg6[%c0_11, %c0_12], %15 {strides = array<i32>} : memref<16x256xf32, #tpu.memory_space<vmem>>, vector<16x256xf32>,
    return
  }
  func.func @transform_0(%arg0: i32) -> (i32, i32) {
    %c0_i32 = arith.constant 0 : i32
    %c0_i32_0 = arith.constant 0 : i32
    return %arg0, %c0_i32 : i32, i32
  }
  func.func @transform_1(%arg0: i32) -> (i32, i32) {
    %c0_i32 = arith.constant 0 : i32
    %c0_i32_0 = arith.constant 0 : i32
    %c0_i32_1 = arith.constant 0 : i32
    return %c0_i32, %c0_i32_0 : i32, i32
  }
  func.func @transform_2(%arg0: i32) -> (i32, i32) {
    %c0_i32 = arith.constant 0 : i32
    %c0_i32_0 = arith.constant 0 : i32
    %c0_i32_1 = arith.constant 0 : i32
    return %c0_i32, %c0_i32_0 : i32, i32
  }
  func.func @transform_3(%arg0: i32) -> (i32, i32) {
    %c0_i32 = arith.constant 0 : i32
    %c0_i32_0 = arith.constant 0 : i32
    %c0_i32_1 = arith.constant 0 : i32
    return %c0_i32, %c0_i32_0 : i32, i32
  }
  func.func @transform_4(%arg0: i32) -> (i32, i32) {
    %c0_i32 = arith.constant 0 : i32
    %c0_i32_0 = arith.constant 0 : i32
    %c0_i32_1 = arith.constant 0 : i32
    return %c0_i32, %c0_i32_0 : i32, i32
  }
  func.func @transform_5(%arg0: i32) -> (i32, i32) {
    %c0_i32 = arith.constant 0 : i32
    %c0_i32_0 = arith.constant 0 : i32
    return %arg0, %c0_i32 : i32, i32
  }
}

</mosaic_0001>

<llo_original>
// kernel: ffn_pallas.1
$region0: #{ffn_pallas.1}
  #allocation0 [shape = 'u32[]', space=smem, size = 0x4, offset = 0x4, fixed_abs, tag = 'smem constant byte address 0x4 - core index']
  #allocation1 [shape = 'u32[144,128]{1,0:T(1,128)}', space=vmem, size = 0x12000, scoped, tag = 'internal scratch']
  %s0 = inlined_call_operand.vmem [shape: f32[16,256], index: 0, kind: input, shape index: {}]
  %s1 = inlined_call_operand.vmem [shape: bf16[256,1024], index: 1, kind: input, shape index: {}]
  %s2 = inlined_call_operand.vmem [shape: f32[1,1024], index: 2, kind: input, shape index: {}]
  %s3 = inlined_call_operand.vmem [shape: bf16[1024,256], index: 3, kind: input, shape index: {}]
  %s4 = inlined_call_operand.vmem [shape: f32[1,256], index: 4, kind: input, shape index: {}]
  %s5 = inlined_call_operand.hbm [shape: f32[16,256], index: 5, kind: output, shape index: {}]
  %s6 = sld [smem:[#allocation0]]
  $region30: #{ffn_pallas.1} parent=0
    _
  %s8 = ssub.s32 1, %s6
  %s9 = scalar_select 0, %s8, %s6
  $region1: #{ffn_pallas.1} parent=0
    #allocation2 [shape = 'u8[16384]{0}', space=vmem, size = 0x4000, scoped, tag = 'output window, operand 0, single buffered']
    #allocation3 [shape = 's32[1]{0}', space=sflag, size = 0x4, scoped, tag = 'scoped memory for ffn_pallas.1']
    %10 = vsyncpa [#allocation3], 0
    // Predicated region
    $region2: #{ffn_pallas.1} parent=1 // pred_check
      _
    $region3: #{ffn_pallas.1} parent=1 // pred_check_branch
      %12 = sbr.rel (0) target = $region5
    $region4: #{ffn_pallas.1} parent=1 // pred_region
      _
    $region5: #{ffn_pallas.1} parent=1 // pred_fallthru
      _
    // Predicated region
    $region6: #{ffn_pallas.1} parent=1 // pred_check
      _
    $region7: #{ffn_pallas.1} parent=1 // pred_check_branch
      %14 = sbr.rel (0) target = $region9
    $region8: #{ffn_pallas.1} parent=1 // pred_region
      _
    $region9: #{ffn_pallas.1} parent=1 // pred_fallthru
      _
    // Predicated region
    $region10: #{ffn_pallas.1} parent=1 // pred_check
      _
    $region11: #{ffn_pallas.1} parent=1 // pred_check_branch
      %16 = sbr.rel (0) target = $region13
    $region12: #{ffn_pallas.1} parent=1 // pred_region
      _
    $region13: #{ffn_pallas.1} parent=1 // pred_fallthru
      _
    // Predicated region
    $region14: #{ffn_pallas.1} parent=1 // pred_check
      _
    $region15: #{ffn_pallas.1} parent=1 // pred_check_branch
      %18 = sbr.rel (0) target = $region17
    $region16: #{ffn_pallas.1} parent=1 // pred_region
      _
    $region17: #{ffn_pallas.1} parent=1 // pred_fallthru
      _
    // Predicated region
    $region18: #{ffn_pallas.1} parent=1 // pred_check
      _
    $region19: #{ffn_pallas.1} parent=1 // pred_check_branch
      %20 = sbr.rel (0) target = $region21
    $region20: #{ffn_pallas.1} parent=1 // pred_region
      _
    $region21: #{ffn_pallas.1} parent=1 // pred_fallthru
      _
    %v21 = vld [vmem:[%s0] sm:$0xff]
    %v22 = vld [vmem:[%s0 + $0x8] sm:$0xff]
    %v23 = vld [vmem:[%s0 + $0x10] sm:$0xff]
    %v24 = vld [vmem:[%s0 + $0x18] sm:$0xff]
    %v25 = vpack.c.bf16 %v23, %v21
    %v26 = vpack.c.bf16 %v24, %v22
    %v27 = vld [vmem:[%s1] sm:$0xff]
    %v28 = vld [vmem:[%s1 + $0x8] sm:$0xff]
    %v29 = vld [vmem:[%s1 + $0x10] sm:$0xff]
    %v30 = vld [vmem:[%s1 + $0x18] sm:$0xff]
    %v31 = vld [vmem:[%s1 + $0x20] sm:$0xff]
    %v32 = vld [vmem:[%s1 + $0x28] sm:$0xff]
    %v33 = vld [vmem:[%s1 + $0x30] sm:$0xff]
    %v34 = vld [vmem:[%s1 + $0x38] sm:$0xff]
    %v35 = vld [vmem:[%s1 + $0x40] sm:$0xff]
    %v36 = vld [vmem:[%s1 + $0x48] sm:$0xff]
    %v37 = vld [vmem:[%s1 + $0x50] sm:$0xff]
    %v38 = vld [vmem:[%s1 + $0x58] sm:$0xff]
    %v39 = vld [vmem:[%s1 + $0x60] sm:$0xff]
    %v40 = vld [vmem:[%s1 + $0x68] sm:$0xff]
    %v41 = vld [vmem:[%s1 + $0x70] sm:$0xff]
    %v42 = vld [vmem:[%s1 + $0x78] sm:$0xff]
    %v43 = vld [vmem:[%s1 + $0x80] sm:$0xff]
    %v44 = vld [vmem:[%s1 + $0x88] sm:$0xff]
    %v45 = vld [vmem:[%s1 + $0x90] sm:$0xff]
    %v46 = vld [vmem:[%s1 + $0x98] sm:$0xff]
    %v47 = vld [vmem:[%s1 + $0xa0] sm:$0xff]
    %v48 = vld [vmem:[%s1 + $0xa8] sm:$0xff]
    %v49 = vld [vmem:[%s1 + $0xb0] sm:$0xff]
    %v50 = vld [vmem:[%s1 + $0xb8] sm:$0xff]
    %v51 = vld [vmem:[%s1 + $0xc0] sm:$0xff]
    %v52 = vld [vmem:[%s1 + $0xc8] sm:$0xff]
    %v53 = vld [vmem:[%s1 + $0xd0] sm:$0xff]
    %v54 = vld [vmem:[%s1 + $0xd8] sm:$0xff]
    %v55 = vld [vmem:[%s1 + $0xe0] sm:$0xff]
    %v56 = vld [vmem:[%s1 + $0xe8] sm:$0xff]
    %v57 = vld [vmem:[%s1 + $0xf0] sm:$0xff]
    %v58 = vld [vmem:[%s1 + $0xf8] sm:$0xff]
    %v59 = vld [vmem:[%s1 + $0x100] sm:$0xff]
    %v60 = vld [vmem:[%s1 + $0x108] sm:$0xff]
    %v61 = vld [vmem:[%s1 + $0x110] sm:$0xff]
    %v62 = vld [vmem:[%s1 + $0x118] sm:$0xff]
    %v63 = vld [vmem:[%s1 + $0x120] sm:$0xff]
    %v64 = vld [vmem:[%s1 + $0x128] sm:$0xff]
    %v65 = vld [vmem:[%s1 + $0x130] sm:$0xff]
    %v66 = vld [vmem:[%s1 + $0x138] sm:$0xff]
    %v67 = vld [vmem:[%s1 + $0x140] sm:$0xff]
    %v68 = vld [vmem:[%s1 + $0x148] sm:$0xff]
    %v69 = vld [vmem:[%s1 + $0x150] sm:$0xff]
    %v70 = vld [vmem:[%s1 + $0x158] sm:$0xff]
    %v71 = vld [vmem:[%s1 + $0x160] sm:$0xff]
    %v72 = vld [vmem:[%s1 + $0x168] sm:$0xff]
    %v73 = vld [vmem:[%s1 + $0x170] sm:$0xff]
    %v74 = vld [vmem:[%s1 + $0x178] sm:$0xff]
    %v75 = vld [vmem:[%s1 + $0x180] sm:$0xff]
    %v76 = vld [vmem:[%s1 + $0x188] sm:$0xff]
    %v77 = vld [vmem:[%s1 + $0x190] sm:$0xff]
    %v78 = vld [vmem:[%s1 + $0x198] sm:$0xff]
    %v79 = vld [vmem:[%s1 + $0x1a0] sm:$0xff]
    %v80 = vld [vmem:[%s1 + $0x1a8] sm:$0xff]
    %v81 = vld [vmem:[%s1 + $0x1b0] sm:$0xff]
    %v82 = vld [vmem:[%s1 + $0x1b8] sm:$0xff]
    %v83 = vld [vmem:[%s1 + $0x1c0] sm:$0xff]
    %v84 = vld [vmem:[%s1 + $0x1c8] sm:$0xff]
    %v85 = vld [vmem:[%s1 + $0x1d0] sm:$0xff]
    %v86 = vld [vmem:[%s1 + $0x1d8] sm:$0xff]
    %v87 = vld [vmem:[%s1 + $0x1e0] sm:$0xff]
    %v88 = vld [vmem:[%s1 + $0x1e8] sm:$0xff]
    %v89 = vld [vmem:[%s1 + $0x1f0] sm:$0xff]
    %v90 = vld [vmem:[%s1 + $0x1f8] sm:$0xff]
    %v91 = vld [vmem:[%s1 + $0x200] sm:$0xff]
    %v92 = vld [vmem:[%s1 + $0x208] sm:$0xff]
    %v93 = vld [vmem:[%s1 + $0x210] sm:$0xff]
    %v94 = vld [vmem:[%s1 + $0x218] sm:$0xff]
    %v95 = vld [vmem:[%s1 + $0x220] sm:$0xff]
    %v96 = vld [vmem:[%s1 + $0x228] sm:$0xff]
    %v97 = vld [vmem:[%s1 + $0x230] sm:$0xff]
    %v98 = vld [vmem:[%s1 + $0x238] sm:$0xff]
    %v99 = vld [vmem:[%s1 + $0x240] sm:$0xff]
    %v100 = vld [vmem:[%s1 + $0x248] sm:$0xff]
    %v101 = vld [vmem:[%s1 + $0x250] sm:$0xff]
    %v102 = vld [vmem:[%s1 + $0x258] sm:$0xff]
    %v103 = vld [vmem:[%s1 + $0x260] sm:$0xff]
    %v104 = vld [vmem:[%s1 + $0x268] sm:$0xff]
    %v105 = vld [vmem:[%s1 + $0x270] sm:$0xff]
    %v106 = vld [vmem:[%s1 + $0x278] sm:$0xff]
    %v107 = vld [vmem:[%s1 + $0x280] sm:$0xff]
    %v108 = vld [vmem:[%s1 + $0x288] sm:$0xff]
    %v109 = vld [vmem:[%s1 + $0x290] sm:$0xff]
    %v110 = vld [vmem:[%s1 + $0x298] sm:$0xff]
    %v111 = vld [vmem:[%s1 + $0x2a0] sm:$0xff]
    %v112 = vld [vmem:[%s1 + $0x2a8] sm:$0xff]
    %v113 = vld [vmem:[%s1 + $0x2b0] sm:$0xff]
    %v114 = vld [vmem:[%s1 + $0x2b8] sm:$0xff]
    %v115 = vld [vmem:[%s1 + $0x2c0] sm:$0xff]
    %v116 = vld [vmem:[%s1 + $0x2c8] sm:$0xff]
    %v117 = vld [vmem:[%s1 + $0x2d0] sm:$0xff]
    %v118 = vld [vmem:[%s1 + $0x2d8] sm:$0xff]
    %v119 = vld [vmem:[%s1 + $0x2e0] sm:$0xff]
    %v120 = vld [vmem:[%s1 + $0x2e8] sm:$0xff]
    %v121 = vld [vmem:[%s1 + $0x2f0] sm:$0xff]
    %v122 = vld [vmem:[%s1 + $0x2f8] sm:$0xff]
    %v123 = vld [vmem:[%s1 + $0x300] sm:$0xff]
    %v124 = vld [vmem:[%s1 + $0x308] sm:$0xff]
    %v125 = vld [vmem:[%s1 + $0x310] sm:$0xff]
    %v126 = vld [vmem:[%s1 + $0x318] sm:$0xff]
    %v127 = vld [vmem:[%s1 + $0x320] sm:$0xff]
    %v128 = vld [vmem:[%s1 + $0x328] sm:$0xff]
    %v129 = vld [vmem:[%s1 + $0x330] sm:$0xff]
    %v130 = vld [vmem:[%s1 + $0x338] sm:$0xff]
    %v131 = vld [vmem:[%s1 + $0x340] sm:$0xff]
    %v132 = vld [vmem:[%s1 + $0x348] sm:$0xff]
    %v133 = vld [vmem:[%s1 + $0x350] sm:$0xff]
    %v134 = vld [vmem:[%s1 + $0x358] sm:$0xff]
    %v135 = vld [vmem:[%s1 + $0x360] sm:$0xff]
    %v136 = vld [vmem:[%s1 + $0x368] sm:$0xff]
    %v137 = vld [vmem:[%s1 + $0x370] sm:$0xff]
    %v138 = vld [vmem:[%s1 + $0x378] sm:$0xff]
    %v139 = vld [vmem:[%s1 + $0x380] sm:$0xff]
    %v140 = vld [vmem:[%s1 + $0x388] sm:$0xff]
    %v141 = vld [vmem:[%s1 + $0x390] sm:$0xff]
    %v142 = vld [vmem:[%s1 + $0x398] sm:$0xff]
    %v143 = vld [vmem:[%s1 + $0x3a0] sm:$0xff]
    %v144 = vld [vmem:[%s1 + $0x3a8] sm:$0xff]
    %v145 = vld [vmem:[%s1 + $0x3b0] sm:$0xff]
    %v146 = vld [vmem:[%s1 + $0x3b8] sm:$0xff]
    %v147 = vld [vmem:[%s1 + $0x3c0] sm:$0xff]
    %v148 = vld [vmem:[%s1 + $0x3c8] sm:$0xff]
    %v149 = vld [vmem:[%s1 + $0x3d0] sm:$0xff]
    %v150 = vld [vmem:[%s1 + $0x3d8] sm:$0xff]
    %v151 = vld [vmem:[%s1 + $0x3e0] sm:$0xff]
    %v152 = vld [vmem:[%s1 + $0x3e8] sm:$0xff]
    %v153 = vld [vmem:[%s1 + $0x3f0] sm:$0xff]
    %v154 = vld [vmem:[%s1 + $0x3f8] sm:$0xff]
    %v155 = vld [vmem:[%s2] sm:$0xff]
    %v157 = vlaneseq
    %v158 = vshrl.u32 %v157, 7
    %v159 = vsub.s32 0, %v158
    %v160 = vrot.slane %v155, %v159
    %v161 = vlaneseq
    %v162 = vshrl.u32 %v161, 7
    %v163 = vsub.s32 1, %v162
    %v164 = vrot.slane %v155, %v163
    %v165 = vlaneseq
    %v166 = vshrl.u32 %v165, 7
    %v167 = vsub.s32 2, %v166
    %v168 = vrot.slane %v155, %v167
    %v169 = vlaneseq
    %v170 = vshrl.u32 %v169, 7
    %v171 = vsub.s32 3, %v170
    %v172 = vrot.slane %v155, %v171
    %v173 = vlaneseq
    %v174 = vshrl.u32 %v173, 7
    %v175 = vsub.s32 4, %v174
    %v176 = vrot.slane %v155, %v175
    %v177 = vlaneseq
    %v178 = vshrl.u32 %v177, 7
    %v179 = vsub.s32 5, %v178
    %v180 = vrot.slane %v155, %v179
    %v181 = vlaneseq
    %v182 = vshrl.u32 %v181, 7
    %v183 = vsub.s32 6, %v182
    %v184 = vrot.slane %v155, %v183
    %v185 = vlaneseq
    %v186 = vshrl.u32 %v185, 7
    %v187 = vsub.s32 7, %v186
    %v188 = vrot.slane %v155, %v187
    %v325 = vunpack.c.l.b16 %v27
    %v326 = vunpack.c.h.b16 %v27
    %v327 = vunpack.c.l.b16 %v28
    %v328 = vunpack.c.h.b16 %v28
    %v329 = vunpack.c.l.b16 %v29
    %v330 = vunpack.c.h.b16 %v29
    %v331 = vunpack.c.l.b16 %v30
    %v332 = vunpack.c.h.b16 %v30
    %v333 = vunpack.c.l.b16 %v31
    %v334 = vunpack.c.h.b16 %v31
    %v335 = vunpack.c.l.b16 %v32
    %v336 = vunpack.c.h.b16 %v32
    %v337 = vunpack.c.l.b16 %v33
    %v338 = vunpack.c.h.b16 %v33
    %v339 = vunpack.c.l.b16 %v34
    %v340 = vunpack.c.h.b16 %v34
    %v341 = vunpack.c.l.b16 %v35
    %v342 = vunpack.c.h.b16 %v35
    %v343 = vunpack.c.l.b16 %v36
    %v344 = vunpack.c.h.b16 %v36
    %v345 = vunpack.c.l.b16 %v37
    %v346 = vunpack.c.h.b16 %v37
    %v347 = vunpack.c.l.b16 %v38
    %v348 = vunpack.c.h.b16 %v38
    %v349 = vunpack.c.l.b16 %v39
    %v350 = vunpack.c.h.b16 %v39
    %v351 = vunpack.c.l.b16 %v40
    %v352 = vunpack.c.h.b16 %v40
    %v353 = vunpack.c.l.b16 %v41
    %v354 = vunpack.c.h.b16 %v41
    %v355 = vunpack.c.l.b16 %v42
    %v356 = vunpack.c.h.b16 %v42
    %v357 = vunpack.c.l.b16 %v43
    %v358 = vunpack.c.h.b16 %v43
    %v359 = vunpack.c.l.b16 %v44
    %v360 = vunpack.c.h.b16 %v44
    %v361 = vunpack.c.l.b16 %v45
    %v362 = vunpack.c.h.b16 %v45
    %v363 = vunpack.c.l.b16 %v46
    %v364 = vunpack.c.h.b16 %v46
    %v365 = vunpack.c.l.b16 %v47
    %v366 = vunpack.c.h.b16 %v47
    %v367 = vunpack.c.l.b16 %v48
    %v368 = vunpack.c.h.b16 %v48
    %v369 = vunpack.c.l.b16 %v49
    %v370 = vunpack.c.h.b16 %v49
    %v371 = vunpack.c.l.b16 %v50
    %v372 = vunpack.c.h.b16 %v50
    %v373 = vunpack.c.l.b16 %v51
    %v374 = vunpack.c.h.b16 %v51
    %v375 = vunpack.c.l.b16 %v52
    %v376 = vunpack.c.h.b16 %v52
    %v377 = vunpack.c.l.b16 %v53
    %v378 = vunpack.c.h.b16 %v53
    %v379 = vunpack.c.l.b16 %v54
    %v380 = vunpack.c.h.b16 %v54
    %v381 = vunpack.c.l.b16 %v55
    %v382 = vunpack.c.h.b16 %v55
    %v383 = vunpack.c.l.b16 %v56
    %v384 = vunpack.c.h.b16 %v56
    %v385 = vunpack.c.l.b16 %v57
    %v386 = vunpack.c.h.b16 %v57
    %v387 = vunpack.c.l.b16 %v58
    %v388 = vunpack.c.h.b16 %v58
    %v389 = vunpack.c.l.b16 %v59
    %v390 = vunpack.c.h.b16 %v59
    %v391 = vunpack.c.l.b16 %v60
    %v392 = vunpack.c.h.b16 %v60
    %v393 = vunpack.c.l.b16 %v61
    %v394 = vunpack.c.h.b16 %v61
    %v395 = vunpack.c.l.b16 %v62
    %v396 = vunpack.c.h.b16 %v62
    %v397 = vunpack.c.l.b16 %v63
    %v398 = vunpack.c.h.b16 %v63
    %v399 = vunpack.c.l.b16 %v64
    %v400 = vunpack.c.h.b16 %v64
    %v401 = vunpack.c.l.b16 %v65
    %v402 = vunpack.c.h.b16 %v65
    %v403 = vunpack.c.l.b16 %v66
    %v404 = vunpack.c.h.b16 %v66
    %v405 = vunpack.c.l.b16 %v67
    %v406 = vunpack.c.h.b16 %v67
    %v407 = vunpack.c.l.b16 %v68
    %v408 = vunpack.c.h.b16 %v68
    %v409 = vunpack.c.l.b16 %v69
    %v410 = vunpack.c.h.b16 %v69
    %v411 = vunpack.c.l.b16 %v70
    %v412 = vunpack.c.h.b16 %v70
    %v413 = vunpack.c.l.b16 %v71
    %v414 = vunpack.c.h.b16 %v71
    %v415 = vunpack.c.l.b16 %v72
    %v416 = vunpack.c.h.b16 %v72
    %v417 = vunpack.c.l.b16 %v73
    %v418 = vunpack.c.h.b16 %v73
    %v419 = vunpack.c.l.b16 %v74
    %v420 = vunpack.c.h.b16 %v74
    %v421 = vunpack.c.l.b16 %v75
    %v422 = vunpack.c.h.b16 %v75
    %v423 = vunpack.c.l.b16 %v76
    %v424 = vunpack.c.h.b16 %v76
    %v425 = vunpack.c.l.b16 %v77
    %v426 = vunpack.c.h.b16 %v77
    %v427 = vunpack.c.l.b16 %v78
    %v428 = vunpack.c.h.b16 %v78
    %v429 = vunpack.c.l.b16 %v79
    %v430 = vunpack.c.h.b16 %v79
    %v431 = vunpack.c.l.b16 %v80
    %v432 = vunpack.c.h.b16 %v80
    %v433 = vunpack.c.l.b16 %v81
    %v434 = vunpack.c.h.b16 %v81
    %v435 = vunpack.c.l.b16 %v82
    %v436 = vunpack.c.h.b16 %v82
    %v437 = vunpack.c.l.b16 %v83
    %v438 = vunpack.c.h.b16 %v83
    %v439 = vunpack.c.l.b16 %v84
    %v440 = vunpack.c.h.b16 %v84
    %v441 = vunpack.c.l.b16 %v85
    %v442 = vunpack.c.h.b16 %v85
    %v443 = vunpack.c.l.b16 %v86
    %v444 = vunpack.c.h.b16 %v86
    %v445 = vunpack.c.l.b16 %v87
    %v446 = vunpack.c.h.b16 %v87
    %v447 = vunpack.c.l.b16 %v88
    %v448 = vunpack.c.h.b16 %v88
    %v449 = vunpack.c.l.b16 %v89
    %v450 = vunpack.c.h.b16 %v89
    %v451 = vunpack.c.l.b16 %v90
    %v452 = vunpack.c.h.b16 %v90
    %v453 = vunpack.c.l.b16 %v91
    %v454 = vunpack.c.h.b16 %v91
    %v455 = vunpack.c.l.b16 %v92
    %v456 = vunpack.c.h.b16 %v92
    %v457 = vunpack.c.l.b16 %v93
    %v458 = vunpack.c.h.b16 %v93
    %v459 = vunpack.c.l.b16 %v94
    %v460 = vunpack.c.h.b16 %v94
    %v461 = vunpack.c.l.b16 %v95
    %v462 = vunpack.c.h.b16 %v95
    %v463 = vunpack.c.l.b16 %v96
    %v464 = vunpack.c.h.b16 %v96
    %v465 = vunpack.c.l.b16 %v97
    %v466 = vunpack.c.h.b16 %v97
    %v467 = vunpack.c.l.b16 %v98
    %v468 = vunpack.c.h.b16 %v98
    %v469 = vunpack.c.l.b16 %v99
    %v470 = vunpack.c.h.b16 %v99
    %v471 = vunpack.c.l.b16 %v100
    %v472 = vunpack.c.h.b16 %v100
    %v473 = vunpack.c.l.b16 %v101
    %v474 = vunpack.c.h.b16 %v101
    %v475 = vunpack.c.l.b16 %v102
    %v476 = vunpack.c.h.b16 %v102
    %v477 = vunpack.c.l.b16 %v103
    %v478 = vunpack.c.h.b16 %v103
    %v479 = vunpack.c.l.b16 %v104
    %v480 = vunpack.c.h.b16 %v104
    %v481 = vunpack.c.l.b16 %v105
    %v482 = vunpack.c.h.b16 %v105
    %v483 = vunpack.c.l.b16 %v106
    %v484 = vunpack.c.h.b16 %v106
    %v485 = vunpack.c.l.b16 %v107
    %v486 = vunpack.c.h.b16 %v107
    %v487 = vunpack.c.l.b16 %v108
    %v488 = vunpack.c.h.b16 %v108
    %v489 = vunpack.c.l.b16 %v109
    %v490 = vunpack.c.h.b16 %v109
    %v491 = vunpack.c.l.b16 %v110
    %v492 = vunpack.c.h.b16 %v110
    %v493 = vunpack.c.l.b16 %v111
    %v494 = vunpack.c.h.b16 %v111
    %v495 = vunpack.c.l.b16 %v112
    %v496 = vunpack.c.h.b16 %v112
    %v497 = vunpack.c.l.b16 %v113
    %v498 = vunpack.c.h.b16 %v113
    %v499 = vunpack.c.l.b16 %v114
    %v500 = vunpack.c.h.b16 %v114
    %v501 = vunpack.c.l.b16 %v115
    %v502 = vunpack.c.h.b16 %v115
    %v503 = vunpack.c.l.b16 %v116
    %v504 = vunpack.c.h.b16 %v116
    %v505 = vunpack.c.l.b16 %v117
    %v506 = vunpack.c.h.b16 %v117
    %v507 = vunpack.c.l.b16 %v118
    %v508 = vunpack.c.h.b16 %v118
    %v509 = vunpack.c.l.b16 %v119
    %v510 = vunpack.c.h.b16 %v119
    %v511 = vunpack.c.l.b16 %v120
    %v512 = vunpack.c.h.b16 %v120
    %v513 = vunpack.c.l.b16 %v121
    %v514 = vunpack.c.h.b16 %v121
    %v515 = vunpack.c.l.b16 %v122
    %v516 = vunpack.c.h.b16 %v122
    %v517 = vunpack.c.l.b16 %v123
    %v518 = vunpack.c.h.b16 %v123
    %v519 = vunpack.c.l.b16 %v124
    %v520 = vunpack.c.h.b16 %v124
    %v521 = vunpack.c.l.b16 %v125
    %v522 = vunpack.c.h.b16 %v125
    %v523 = vunpack.c.l.b16 %v126
    %v524 = vunpack.c.h.b16 %v126
    %v525 = vunpack.c.l.b16 %v127
    %v526 = vunpack.c.h.b16 %v127
    %v527 = vunpack.c.l.b16 %v128
    %v528 = vunpack.c.h.b16 %v128
    %v529 = vunpack.c.l.b16 %v129
    %v530 = vunpack.c.h.b16 %v129
    %v531 = vunpack.c.l.b16 %v130
    %v532 = vunpack.c.h.b16 %v130
    %v533 = vunpack.c.l.b16 %v131
    %v534 = vunpack.c.h.b16 %v131
    %v535 = vunpack.c.l.b16 %v132
    %v536 = vunpack.c.h.b16 %v132
    %v537 = vunpack.c.l.b16 %v133
    %v538 = vunpack.c.h.b16 %v133
    %v539 = vunpack.c.l.b16 %v134
    %v540 = vunpack.c.h.b16 %v134
    %v541 = vunpack.c.l.b16 %v135
    %v542 = vunpack.c.h.b16 %v135
    %v543 = vunpack.c.l.b16 %v136
    %v544 = vunpack.c.h.b16 %v136
    %v545 = vunpack.c.l.b16 %v137
    %v546 = vunpack.c.h.b16 %v137
    %v547 = vunpack.c.l.b16 %v138
    %v548 = vunpack.c.h.b16 %v138
    %v549 = vunpack.c.l.b16 %v139
    %v550 = vunpack.c.h.b16 %v139
    %v551 = vunpack.c.l.b16 %v140
    %v552 = vunpack.c.h.b16 %v140
    %v553 = vunpack.c.l.b16 %v141
    %v554 = vunpack.c.h.b16 %v141
    %v555 = vunpack.c.l.b16 %v142
    %v556 = vunpack.c.h.b16 %v142
    %v557 = vunpack.c.l.b16 %v143
    %v558 = vunpack.c.h.b16 %v143
    %v559 = vunpack.c.l.b16 %v144
    %v560 = vunpack.c.h.b16 %v144
    %v561 = vunpack.c.l.b16 %v145
    %v562 = vunpack.c.h.b16 %v145
    %v563 = vunpack.c.l.b16 %v146
    %v564 = vunpack.c.h.b16 %v146
    %v565 = vunpack.c.l.b16 %v147
    %v566 = vunpack.c.h.b16 %v147
    %v567 = vunpack.c.l.b16 %v148
    %v568 = vunpack.c.h.b16 %v148
    %v569 = vunpack.c.l.b16 %v149
    %v570 = vunpack.c.h.b16 %v149
    %v571 = vunpack.c.l.b16 %v150
    %v572 = vunpack.c.h.b16 %v150
    %v573 = vunpack.c.l.b16 %v151
    %v574 = vunpack.c.h.b16 %v151
    %v575 = vunpack.c.l.b16 %v152
    %v576 = vunpack.c.h.b16 %v152
    %v577 = vunpack.c.l.b16 %v153
    %v578 = vunpack.c.h.b16 %v153
    %v579 = vunpack.c.l.b16 %v154
    %v580 = vunpack.c.h.b16 %v154
    %v581 = vpack.c.b16 %v333, %v325
    %v582 = vpack.c.b16 %v334, %v326
    %v583 = vpack.c.b16 %v335, %v327
    %v584 = vpack.c.b16 %v336, %v328
    %v585 = vpack.c.b16 %v337, %v329
    %v586 = vpack.c.b16 %v338, %v330
    %v587 = vpack.c.b16 %v339, %v331
    %v588 = vpack.c.b16 %v340, %v332
    %v589 = vpack.c.b16 %v349, %v341
    %v590 = vpack.c.b16 %v350, %v342
    %v591 = vpack.c.b16 %v351, %v343
    %v592 = vpack.c.b16 %v352, %v344
    %v593 = vpack.c.b16 %v353, %v345
    %v594 = vpack.c.b16 %v354, %v346
    %v595 = vpack.c.b16 %v355, %v347
    %v596 = vpack.c.b16 %v356, %v348
    %v597 = vpack.c.b16 %v365, %v357
    %v598 = vpack.c.b16 %v366, %v358
    %v599 = vpack.c.b16 %v367, %v359
    %v600 = vpack.c.b16 %v368, %v360
    %v601 = vpack.c.b16 %v369, %v361
    %v602 = vpack.c.b16 %v370, %v362
    %v603 = vpack.c.b16 %v371, %v363
    %v604 = vpack.c.b16 %v372, %v364
    %v605 = vpack.c.b16 %v381, %v373
    %v606 = vpack.c.b16 %v382, %v374
    %v607 = vpack.c.b16 %v383, %v375
    %v608 = vpack.c.b16 %v384, %v376
    %v609 = vpack.c.b16 %v385, %v377
    %v610 = vpack.c.b16 %v386, %v378
    %v611 = vpack.c.b16 %v387, %v379
    %v612 = vpack.c.b16 %v388, %v380
    %v613 = vpack.c.b16 %v397, %v389
    %v614 = vpack.c.b16 %v398, %v390
    %v615 = vpack.c.b16 %v399, %v391
    %v616 = vpack.c.b16 %v400, %v392
    %v617 = vpack.c.b16 %v401, %v393
    %v618 = vpack.c.b16 %v402, %v394
    %v619 = vpack.c.b16 %v403, %v395
    %v620 = vpack.c.b16 %v404, %v396
    %v621 = vpack.c.b16 %v413, %v405
    %v622 = vpack.c.b16 %v414, %v406
    %v623 = vpack.c.b16 %v415, %v407
    %v624 = vpack.c.b16 %v416, %v408
    %v625 = vpack.c.b16 %v417, %v409
    %v626 = vpack.c.b16 %v418, %v410
    %v627 = vpack.c.b16 %v419, %v411
    %v628 = vpack.c.b16 %v420, %v412
    %v629 = vpack.c.b16 %v429, %v421
    %v630 = vpack.c.b16 %v430, %v422
    %v631 = vpack.c.b16 %v431, %v423
    %v632 = vpack.c.b16 %v432, %v424
    %v633 = vpack.c.b16 %v433, %v425
    %v634 = vpack.c.b16 %v434, %v426
    %v635 = vpack.c.b16 %v435, %v427
    %v636 = vpack.c.b16 %v436, %v428
    %v637 = vpack.c.b16 %v445, %v437
    %v638 = vpack.c.b16 %v446, %v438
    %v639 = vpack.c.b16 %v447, %v439
    %v640 = vpack.c.b16 %v448, %v440
    %v641 = vpack.c.b16 %v449, %v441
    %v642 = vpack.c.b16 %v450, %v442
    %v643 = vpack.c.b16 %v451, %v443
    %v644 = vpack.c.b16 %v452, %v444
    %v645 = vpack.c.b16 %v461, %v453
    %v646 = vpack.c.b16 %v462, %v454
    %v647 = vpack.c.b16 %v463, %v455
    %v648 = vpack.c.b16 %v464, %v456
    %v649 = vpack.c.b16 %v465, %v457
    %v650 = vpack.c.b16 %v466, %v458
    %v651 = vpack.c.b16 %v467, %v459
    %v652 = vpack.c.b16 %v468, %v460
    %v653 = vpack.c.b16 %v477, %v469
    %v654 = vpack.c.b16 %v478, %v470
    %v655 = vpack.c.b16 %v479, %v471
    %v656 = vpack.c.b16 %v480, %v472
    %v657 = vpack.c.b16 %v481, %v473
    %v658 = vpack.c.b16 %v482, %v474
    %v659 = vpack.c.b16 %v483, %v475
    %v660 = vpack.c.b16 %v484, %v476
    %v661 = vpack.c.b16 %v493, %v485
    %v662 = vpack.c.b16 %v494, %v486
    %v663 = vpack.c.b16 %v495, %v487
    %v664 = vpack.c.b16 %v496, %v488
    %v665 = vpack.c.b16 %v497, %v489
    %v666 = vpack.c.b16 %v498, %v490
    %v667 = vpack.c.b16 %v499, %v491
    %v668 = vpack.c.b16 %v500, %v492
    %v669 = vpack.c.b16 %v509, %v501
    %v670 = vpack.c.b16 %v510, %v502
    %v671 = vpack.c.b16 %v511, %v503
    %v672 = vpack.c.b16 %v512, %v504
    %v673 = vpack.c.b16 %v513, %v505
    %v674 = vpack.c.b16 %v514, %v506
    %v675 = vpack.c.b16 %v515, %v507
    %v676 = vpack.c.b16 %v516, %v508
    %v677 = vpack.c.b16 %v525, %v517
    %v678 = vpack.c.b16 %v526, %v518
    %v679 = vpack.c.b16 %v527, %v519
    %v680 = vpack.c.b16 %v528, %v520
    %v681 = vpack.c.b16 %v529, %v521
    %v682 = vpack.c.b16 %v530, %v522
    %v683 = vpack.c.b16 %v531, %v523
    %v684 = vpack.c.b16 %v532, %v524
    %v685 = vpack.c.b16 %v541, %v533
    %v686 = vpack.c.b16 %v542, %v534
    %v687 = vpack.c.b16 %v543, %v535
    %v688 = vpack.c.b16 %v544, %v536
    %v689 = vpack.c.b16 %v545, %v537
    %v690 = vpack.c.b16 %v546, %v538
    %v691 = vpack.c.b16 %v547, %v539
    %v692 = vpack.c.b16 %v548, %v540
    %v693 = vpack.c.b16 %v557, %v549
    %v694 = vpack.c.b16 %v558, %v550
    %v695 = vpack.c.b16 %v559, %v551
    %v696 = vpack.c.b16 %v560, %v552
    %v697 = vpack.c.b16 %v561, %v553
    %v698 = vpack.c.b16 %v562, %v554
    %v699 = vpack.c.b16 %v563, %v555
    %v700 = vpack.c.b16 %v564, %v556
    %v701 = vpack.c.b16 %v573, %v565
    %v702 = vpack.c.b16 %v574, %v566
    %v703 = vpack.c.b16 %v575, %v567
    %v704 = vpack.c.b16 %v576, %v568
    %v705 = vpack.c.b16 %v577, %v569
    %v706 = vpack.c.b16 %v578, %v570
    %v707 = vpack.c.b16 %v579, %v571
    %v708 = vpack.c.b16 %v580, %v572
    %837 = vmatprep.subr.bf16.mxu0 %v582
    %838 = vmatpush1.bf16.msra.mxu0 %v581
    %839 = vmatprep.subr.bf16.mxu0 %v590
    %840 = vmatpush1.bf16.msra.mxu0 %v589
    %841 = vmatprep.subr.bf16.mxu0 %v598
    %842 = vmatpush1.bf16.msra.mxu0 %v597
    %843 = vmatprep.subr.bf16.mxu0 %v606
    %844 = vmatpush1.bf16.msra.mxu0 %v605
    %845 = vmatprep.subr.bf16.mxu0 %v614
    %846 = vmatpush1.bf16.msra.mxu0 %v613
    %847 = vmatprep.subr.bf16.mxu0 %v622
    %848 = vmatpush1.bf16.msra.mxu0 %v621
    %849 = vmatprep.subr.bf16.mxu0 %v630
    %850 = vmatpush1.bf16.msra.mxu0 %v629
    %851 = vmatprep.subr.bf16.mxu0 %v638
    %852 = vmatpush1.bf16.msra.mxu0 %v637
    %853 = vmatprep.subr.bf16.mxu0 %v646
    %854 = vmatpush1.bf16.msra.mxu0 %v645
    %855 = vmatprep.subr.bf16.mxu0 %v654
    %856 = vmatpush1.bf16.msra.mxu0 %v653
    %857 = vmatprep.subr.bf16.mxu0 %v662
    %858 = vmatpush1.bf16.msra.mxu0 %v661
    %859 = vmatprep.subr.bf16.mxu0 %v670
    %860 = vmatpush1.bf16.msra.mxu0 %v669
    %861 = vmatprep.subr.bf16.mxu0 %v678
    %862 = vmatpush1.bf16.msra.mxu0 %v677
    %863 = vmatprep.subr.bf16.mxu0 %v686
    %864 = vmatpush1.bf16.msra.mxu0 %v685
    %865 = vmatprep.subr.bf16.mxu0 %v694
    %866 = vmatpush1.bf16.msra.mxu0 %v693
    %867 = vmatprep.subr.bf16.mxu0 %v702
    %868 = vmatpush1.bf16.msra.mxu0 %v701
    %869 = vmatprep.mubr.bf16.mxu0 %v26
    %870 = vmatmul.mubr.bf16.gmra.mrb[0].mxu0 %v25
    %v871 = vpop.f32.mrb[0].mxu0
    %v872 = vadd.f32 %v160, %v871
    %v873 = vpop.f32.mrb[0].mxu0
    %v874 = vadd.f32 %v164, %v873
    %v875 = vpop.f32.mrb[0].mxu0
    %v876 = vadd.f32 %v160, %v875
    %v877 = vpop.f32.mrb[0].mxu0
    %v878 = vadd.f32 %v164, %v877
    %879 = vdwg.mxu0
    %880 = vmatprep.subr.bf16.mxu0 %v584
    %881 = vmatpush1.bf16.msra.mxu0 %v583
    %882 = vmatprep.subr.bf16.mxu0 %v592
    %883 = vmatpush1.bf16.msra.mxu0 %v591
    %884 = vmatprep.subr.bf16.mxu0 %v600
    %885 = vmatpush1.bf16.msra.mxu0 %v599
    %886 = vmatprep.subr.bf16.mxu0 %v608
    %887 = vmatpush1.bf16.msra.mxu0 %v607
    %888 = vmatprep.subr.bf16.mxu0 %v616
    %889 = vmatpush1.bf16.msra.mxu0 %v615
    %890 = vmatprep.subr.bf16.mxu0 %v624
    %891 = vmatpush1.bf16.msra.mxu0 %v623
    %892 = vmatprep.subr.bf16.mxu0 %v632
    %893 = vmatpush1.bf16.msra.mxu0 %v631
    %894 = vmatprep.subr.bf16.mxu0 %v640
    %895 = vmatpush1.bf16.msra.mxu0 %v639
    %896 = vmatprep.subr.bf16.mxu0 %v648
    %897 = vmatpush1.bf16.msra.mxu0 %v647
    %898 = vmatprep.subr.bf16.mxu0 %v656
    %899 = vmatpush1.bf16.msra.mxu0 %v655
    %900 = vmatprep.subr.bf16.mxu0 %v664
    %901 = vmatpush1.bf16.msra.mxu0 %v663
    %902 = vmatprep.subr.bf16.mxu0 %v672
    %903 = vmatpush1.bf16.msra.mxu0 %v671
    %904 = vmatprep.subr.bf16.mxu0 %v680
    %905 = vmatpush1.bf16.msra.mxu0 %v679
    %906 = vmatprep.subr.bf16.mxu0 %v688
    %907 = vmatpush1.bf16.msra.mxu0 %v687
    %908 = vmatprep.subr.bf16.mxu0 %v696
    %909 = vmatpush1.bf16.msra.mxu0 %v695
    %910 = vmatprep.subr.bf16.mxu0 %v704
    %911 = vmatpush1.bf16.msra.mxu0 %v703
    %912 = vmatprep.mubr.bf16.mxu0 %v26
    %913 = vmatmul.mubr.bf16.gmra.mrb[0].mxu0 %v25
    %v914 = vpop.f32.mrb[0].mxu0
    %v915 = vadd.f32 %v168, %v914
    %v916 = vpop.f32.mrb[0].mxu0
    %v917 = vadd.f32 %v172, %v916
    %v918 = vpop.f32.mrb[0].mxu0
    %v919 = vadd.f32 %v168, %v918
    %v920 = vpop.f32.mrb[0].mxu0
    %v921 = vadd.f32 %v172, %v920
    %922 = vdwg.mxu0
    %923 = vmatprep.subr.bf16.mxu0 %v586
    %924 = vmatpush1.bf16.msra.mxu0 %v585
    %925 = vmatprep.subr.bf16.mxu0 %v594
    %926 = vmatpush1.bf16.msra.mxu0 %v593
    %927 = vmatprep.subr.bf16.mxu0 %v602
    %928 = vmatpush1.bf16.msra.mxu0 %v601
    %929 = vmatprep.subr.bf16.mxu0 %v610
    %930 = vmatpush1.bf16.msra.mxu0 %v609
    %931 = vmatprep.subr.bf16.mxu0 %v618
    %932 = vmatpush1.bf16.msra.mxu0 %v617
    %933 = vmatprep.subr.bf16.mxu0 %v626
    %934 = vmatpush1.bf16.msra.mxu0 %v625
    %935 = vmatprep.subr.bf16.mxu0 %v634
    %936 = vmatpush1.bf16.msra.mxu0 %v633
    %937 = vmatprep.subr.bf16.mxu0 %v642
    %938 = vmatpush1.bf16.msra.mxu0 %v641
    %939 = vmatprep.subr.bf16.mxu0 %v650
    %940 = vmatpush1.bf16.msra.mxu0 %v649
    %941 = vmatprep.subr.bf16.mxu0 %v658
    %942 = vmatpush1.bf16.msra.mxu0 %v657
    %943 = vmatprep.subr.bf16.mxu0 %v666
    %944 = vmatpush1.bf16.msra.mxu0 %v665
    %945 = vmatprep.subr.bf16.mxu0 %v674
    %946 = vmatpush1.bf16.msra.mxu0 %v673
    %947 = vmatprep.subr.bf16.mxu0 %v682
    %948 = vmatpush1.bf16.msra.mxu0 %v681
    %949 = vmatprep.subr.bf16.mxu0 %v690
    %950 = vmatpush1.bf16.msra.mxu0 %v689
    %951 = vmatprep.subr.bf16.mxu0 %v698
    %952 = vmatpush1.bf16.msra.mxu0 %v697
    %953 = vmatprep.subr.bf16.mxu0 %v706
    %954 = vmatpush1.bf16.msra.mxu0 %v705
    %955 = vmatprep.mubr.bf16.mxu0 %v26
    %956 = vmatmul.mubr.bf16.gmra.mrb[0].mxu0 %v25
    %v957 = vpop.f32.mrb[0].mxu0
    %v958 = vadd.f32 %v176, %v957
    %v959 = vpop.f32.mrb[0].mxu0
    %v960 = vadd.f32 %v180, %v959
    %v961 = vpop.f32.mrb[0].mxu0
    %v962 = vadd.f32 %v176, %v961
    %v963 = vpop.f32.mrb[0].mxu0
    %v964 = vadd.f32 %v180, %v963
    %965 = vdwg.mxu0
    %966 = vmatprep.subr.bf16.mxu0 %v588
    %967 = vmatpush1.bf16.msra.mxu0 %v587
    %968 = vmatprep.subr.bf16.mxu0 %v596
    %969 = vmatpush1.bf16.msra.mxu0 %v595
    %970 = vmatprep.subr.bf16.mxu0 %v604
    %971 = vmatpush1.bf16.msra.mxu0 %v603
    %972 = vmatprep.subr.bf16.mxu0 %v612
    %973 = vmatpush1.bf16.msra.mxu0 %v611
    %974 = vmatprep.subr.bf16.mxu0 %v620
    %975 = vmatpush1.bf16.msra.mxu0 %v619
    %976 = vmatprep.subr.bf16.mxu0 %v628
    %977 = vmatpush1.bf16.msra.mxu0 %v627
    %978 = vmatprep.subr.bf16.mxu0 %v636
    %979 = vmatpush1.bf16.msra.mxu0 %v635
    %980 = vmatprep.subr.bf16.mxu0 %v644
    %981 = vmatpush1.bf16.msra.mxu0 %v643
    %982 = vmatprep.subr.bf16.mxu0 %v652
    %983 = vmatpush1.bf16.msra.mxu0 %v651
    %984 = vmatprep.subr.bf16.mxu0 %v660
    %985 = vmatpush1.bf16.msra.mxu0 %v659
    %986 = vmatprep.subr.bf16.mxu0 %v668
    %987 = vmatpush1.bf16.msra.mxu0 %v667
    %988 = vmatprep.subr.bf16.mxu0 %v676
    %989 = vmatpush1.bf16.msra.mxu0 %v675
    %990 = vmatprep.subr.bf16.mxu0 %v684
    %991 = vmatpush1.bf16.msra.mxu0 %v683
    %992 = vmatprep.subr.bf16.mxu0 %v692
    %993 = vmatpush1.bf16.msra.mxu0 %v691
    %994 = vmatprep.subr.bf16.mxu0 %v700
    %995 = vmatpush1.bf16.msra.mxu0 %v699
    %996 = vmatprep.subr.bf16.mxu0 %v708
    %997 = vmatpush1.bf16.msra.mxu0 %v707
    %998 = vmatprep.mubr.bf16.mxu0 %v26
    %999 = vmatmul.mubr.bf16.gmra.mrb[0].mxu0 %v25
    %v1000 = vpop.f32.mrb[0].mxu0
    %v1001 = vadd.f32 %v184, %v1000
    %v1002 = vpop.f32.mrb[0].mxu0
    %v1003 = vadd.f32 %v188, %v1002
    %v1004 = vpop.f32.mrb[0].mxu0
    %v1005 = vadd.f32 %v184, %v1004
    %v1006 = vpop.f32.mrb[0].mxu0
    %v1007 = vadd.f32 %v188, %v1006
    %1008 = vdwg.mxu0
    %v1009 = vmax.f32 %v872, 0.0
    %v1010 = vmax.f32 %v874, 0.0
    %v1011 = vmax.f32 %v915, 0.0
    %v1012 = vmax.f32 %v917, 0.0
    %v1013 = vmax.f32 %v958, 0.0
    %v1014 = vmax.f32 %v960, 0.0
    %v1015 = vmax.f32 %v1001, 0.0
    %v1016 = vmax.f32 %v1003, 0.0
    %v1017 = vmax.f32 %v876, 0.0
    %v1018 = vmax.f32 %v878, 0.0
    %v1019 = vmax.f32 %v919, 0.0
    %v1020 = vmax.f32 %v921, 0.0
    %v1021 = vmax.f32 %v962, 0.0
    %v1022 = vmax.f32 %v964, 0.0
    %v1023 = vmax.f32 %v1005, 0.0
    %v1024 = vmax.f32 %v1007, 0.0
    %v1025 = vpack.c.bf16 %v1017, %v1009
    %v1026 = vpack.c.bf16 %v1018, %v1010
    %v1027 = vpack.c.bf16 %v1019, %v1011
    %v1028 = vpack.c.bf16 %v1020, %v1012
    %v1029 = vpack.c.bf16 %v1021, %v1013
    %v1030 = vpack.c.bf16 %v1022, %v1014
    %v1031 = vpack.c.bf16 %v1023, %v1015
    %v1032 = vpack.c.bf16 %v1024, %v1016
    %v1033 = vld [vmem:[%s3] sm:$0xff]
    %v1034 = vld [vmem:[%s3 + $0x8] sm:$0xff]
    %v1035 = vld [vmem:[%s3 + $0x10] sm:$0xff]
    %v1036 = vld [vmem:[%s3 + $0x18] sm:$0xff]
    %v1037 = vld [vmem:[%s3 + $0x20] sm:$0xff]
    %v1038 = vld [vmem:[%s3 + $0x28] sm:$0xff]
    %v1039 = vld [vmem:[%s3 + $0x30] sm:$0xff]
    %v1040 = vld [vmem:[%s3 + $0x38] sm:$0xff]
    %v1041 = vld [vmem:[%s3 + $0x40] sm:$0xff]
    %v1042 = vld [vmem:[%s3 + $0x48] sm:$0xff]
    %v1043 = vld [vmem:[%s3 + $0x50] sm:$0xff]
    %v1044 = vld [vmem:[%s3 + $0x58] sm:$0xff]
    %v1045 = vld [vmem:[%s3 + $0x60] sm:$0xff]
    %v1046 = vld [vmem:[%s3 + $0x68] sm:$0xff]
    %v1047 = vld [vmem:[%s3 + $0x70] sm:$0xff]
    %v1048 = vld [vmem:[%s3 + $0x78] sm:$0xff]
    %v1049 = vld [vmem:[%s3 + $0x80] sm:$0xff]
    %v1050 = vld [vmem:[%s3 + $0x88] sm:$0xff]
    %v1051 = vld [vmem:[%s3 + $0x90] sm:$0xff]
    %v1052 = vld [vmem:[%s3 + $0x98] sm:$0xff]
    %v1053 = vld [vmem:[%s3 + $0xa0] sm:$0xff]
    %v1054 = vld [vmem:[%s3 + $0xa8] sm:$0xff]
    %v1055 = vld [vmem:[%s3 + $0xb0] sm:$0xff]
    %v1056 = vld [vmem:[%s3 + $0xb8] sm:$0xff]
    %v1057 = vld [vmem:[%s3 + $0xc0] sm:$0xff]
    %v1058 = vld [vmem:[%s3 + $0xc8] sm:$0xff]
    %v1059 = vld [vmem:[%s3 + $0xd0] sm:$0xff]
    %v1060 = vld [vmem:[%s3 + $0xd8] sm:$0xff]
    %v1061 = vld [vmem:[%s3 + $0xe0] sm:$0xff]
    %v1062 = vld [vmem:[%s3 + $0xe8] sm:$0xff]
    %v1063 = vld [vmem:[%s3 + $0xf0] sm:$0xff]
    %v1064 = vld [vmem:[%s3 + $0xf8] sm:$0xff]
    %v1065 = vld [vmem:[%s3 + $0x100] sm:$0xff]
    %v1066 = vld [vmem:[%s3 + $0x108] sm:$0xff]
    %v1067 = vld [vmem:[%s3 + $0x110] sm:$0xff]
    %v1068 = vld [vmem:[%s3 + $0x118] sm:$0xff]
    %v1069 = vld [vmem:[%s3 + $0x120] sm:$0xff]
    %v1070 = vld [vmem:[%s3 + $0x128] sm:$0xff]
    %v1071 = vld [vmem:[%s3 + $0x130] sm:$0xff]
    %v1072 = vld [vmem:[%s3 + $0x138] sm:$0xff]
    %v1073 = vld [vmem:[%s3 + $0x140] sm:$0xff]
    %v1074 = vld [vmem:[%s3 + $0x148] sm:$0xff]
    %v1075 = vld [vmem:[%s3 + $0x150] sm:$0xff]
    %v1076 = vld [vmem:[%s3 + $0x158] sm:$0xff]
    %v1077 = vld [vmem:[%s3 + $0x160] sm:$0xff]
    %v1078 = vld [vmem:[%s3 + $0x168] sm:$0xff]
    %v1079 = vld [vmem:[%s3 + $0x170] sm:$0xff]
    %v1080 = vld [vmem:[%s3 + $0x178] sm:$0xff]
    %v1081 = vld [vmem:[%s3 + $0x180] sm:$0xff]
    %v1082 = vld [vmem:[%s3 + $0x188] sm:$0xff]
    %v1083 = vld [vmem:[%s3 + $0x190] sm:$0xff]
    %v1084 = vld [vmem:[%s3 + $0x198] sm:$0xff]
    %v1085 = vld [vmem:[%s3 + $0x1a0] sm:$0xff]
    %v1086 = vld [vmem:[%s3 + $0x1a8] sm:$0xff]
    %v1087 = vld [vmem:[%s3 + $0x1b0] sm:$0xff]
    %v1088 = vld [vmem:[%s3 + $0x1b8] sm:$0xff]
    %v1089 = vld [vmem:[%s3 + $0x1c0] sm:$0xff]
    %v1090 = vld [vmem:[%s3 + $0x1c8] sm:$0xff]
    %v1091 = vld [vmem:[%s3 + $0x1d0] sm:$0xff]
    %v1092 = vld [vmem:[%s3 + $0x1d8] sm:$0xff]
    %v1093 = vld [vmem:[%s3 + $0x1e0] sm:$0xff]
    %v1094 = vld [vmem:[%s3 + $0x1e8] sm:$0xff]
    %v1095 = vld [vmem:[%s3 + $0x1f0] sm:$0xff]
    %v1096 = vld [vmem:[%s3 + $0x1f8] sm:$0xff]
    %v1097 = vld [vmem:[%s3 + $0x200] sm:$0xff]
    %v1098 = vld [vmem:[%s3 + $0x208] sm:$0xff]
    %v1099 = vld [vmem:[%s3 + $0x210] sm:$0xff]
    %v1100 = vld [vmem:[%s3 + $0x218] sm:$0xff]
    %v1101 = vld [vmem:[%s3 + $0x220] sm:$0xff]
    %v1102 = vld [vmem:[%s3 + $0x228] sm:$0xff]
    %v1103 = vld [vmem:[%s3 + $0x230] sm:$0xff]
    %v1104 = vld [vmem:[%s3 + $0x238] sm:$0xff]
    %v1105 = vld [vmem:[%s3 + $0x240] sm:$0xff]
    %v1106 = vld [vmem:[%s3 + $0x248] sm:$0xff]
    %v1107 = vld [vmem:[%s3 + $0x250] sm:$0xff]
    %v1108 = vld [vmem:[%s3 + $0x258] sm:$0xff]
    %v1109 = vld [vmem:[%s3 + $0x260] sm:$0xff]
    %v1110 = vld [vmem:[%s3 + $0x268] sm:$0xff]
    %v1111 = vld [vmem:[%s3 + $0x270] sm:$0xff]
    %v1112 = vld [vmem:[%s3 + $0x278] sm:$0xff]
    %v1113 = vld [vmem:[%s3 + $0x280] sm:$0xff]
    %v1114 = vld [vmem:[%s3 + $0x288] sm:$0xff]
    %v1115 = vld [vmem:[%s3 + $0x290] sm:$0xff]
    %v1116 = vld [vmem:[%s3 + $0x298] sm:$0xff]
    %v1117 = vld [vmem:[%s3 + $0x2a0] sm:$0xff]
    %v1118 = vld [vmem:[%s3 + $0x2a8] sm:$0xff]
    %v1119 = vld [vmem:[%s3 + $0x2b0] sm:$0xff]
    %v1120 = vld [vmem:[%s3 + $0x2b8] sm:$0xff]
    %v1121 = vld [vmem:[%s3 + $0x2c0] sm:$0xff]
    %v1122 = vld [vmem:[%s3 + $0x2c8] sm:$0xff]
    %v1123 = vld [vmem:[%s3 + $0x2d0] sm:$0xff]
    %v1124 = vld [vmem:[%s3 + $0x2d8] sm:$0xff]
    %v1125 = vld [vmem:[%s3 + $0x2e0] sm:$0xff]
    %v1126 = vld [vmem:[%s3 + $0x2e8] sm:$0xff]
    %v1127 = vld [vmem:[%s3 + $0x2f0] sm:$0xff]
    %v1128 = vld [vmem:[%s3 + $0x2f8] sm:$0xff]
    %v1129 = vld [vmem:[%s3 + $0x300] sm:$0xff]
    %v1130 = vld [vmem:[%s3 + $0x308] sm:$0xff]
    %v1131 = vld [vmem:[%s3 + $0x310] sm:$0xff]
    %v1132 = vld [vmem:[%s3 + $0x318] sm:$0xff]
    %v1133 = vld [vmem:[%s3 + $0x320] sm:$0xff]
    %v1134 = vld [vmem:[%s3 + $0x328] sm:$0xff]
    %v1135 = vld [vmem:[%s3 + $0x330] sm:$0xff]
    %v1136 = vld [vmem:[%s3 + $0x338] sm:$0xff]
    %v1137 = vld [vmem:[%s3 + $0x340] sm:$0xff]
    %v1138 = vld [vmem:[%s3 + $0x348] sm:$0xff]
    %v1139 = vld [vmem:[%s3 + $0x350] sm:$0xff]
    %v1140 = vld [vmem:[%s3 + $0x358] sm:$0xff]
    %v1141 = vld [vmem:[%s3 + $0x360] sm:$0xff]
    %v1142 = vld [vmem:[%s3 + $0x368] sm:$0xff]
    %v1143 = vld [vmem:[%s3 + $0x370] sm:$0xff]
    %v1144 = vld [vmem:[%s3 + $0x378] sm:$0xff]
    %v1145 = vld [vmem:[%s3 + $0x380] sm:$0xff]
    %v1146 = vld [vmem:[%s3 + $0x388] sm:$0xff]
    %v1147 = vld [vmem:[%s3 + $0x390] sm:$0xff]
    %v1148 = vld [vmem:[%s3 + $0x398] sm:$0xff]
    %v1149 = vld [vmem:[%s3 + $0x3a0] sm:$0xff]
    %v1150 = vld [vmem:[%s3 + $0x3a8] sm:$0xff]
    %v1151 = vld [vmem:[%s3 + $0x3b0] sm:$0xff]
    %v1152 = vld [vmem:[%s3 + $0x3b8] sm:$0xff]
    %v1153 = vld [vmem:[%s3 + $0x3c0] sm:$0xff]
    %v1154 = vld [vmem:[%s3 + $0x3c8] sm:$0xff]
    %v1155 = vld [vmem:[%s3 + $0x3d0] sm:$0xff]
    %v1156 = vld [vmem:[%s3 + $0x3d8] sm:$0xff]
    %v1157 = vld [vmem:[%s3 + $0x3e0] sm:$0xff]
    %v1158 = vld [vmem:[%s3 + $0x3e8] sm:$0xff]
    %v1159 = vld [vmem:[%s3 + $0x3f0] sm:$0xff]
    %v1160 = vld [vmem:[%s3 + $0x3f8] sm:$0xff]
    %v1289 = vunpack.c.l.b16 %v1033
    %v1290 = vunpack.c.h.b16 %v1033
    %v1291 = vunpack.c.l.b16 %v1034
    %v1292 = vunpack.c.h.b16 %v1034
    %v1293 = vunpack.c.l.b16 %v1035
    %v1294 = vunpack.c.h.b16 %v1035
    %v1295 = vunpack.c.l.b16 %v1036
    %v1296 = vunpack.c.h.b16 %v1036
    %v1297 = vunpack.c.l.b16 %v1037
    %v1298 = vunpack.c.h.b16 %v1037
    %v1299 = vunpack.c.l.b16 %v1038
    %v1300 = vunpack.c.h.b16 %v1038
    %v1301 = vunpack.c.l.b16 %v1039
    %v1302 = vunpack.c.h.b16 %v1039
    %v1303 = vunpack.c.l.b16 %v1040
    %v1304 = vunpack.c.h.b16 %v1040
    %v1305 = vunpack.c.l.b16 %v1041
    %v1306 = vunpack.c.h.b16 %v1041
    %v1307 = vunpack.c.l.b16 %v1042
    %v1308 = vunpack.c.h.b16 %v1042
    %v1309 = vunpack.c.l.b16 %v1043
    %v1310 = vunpack.c.h.b16 %v1043
    %v1311 = vunpack.c.l.b16 %v1044
    %v1312 = vunpack.c.h.b16 %v1044
    %v1313 = vunpack.c.l.b16 %v1045
    %v1314 = vunpack.c.h.b16 %v1045
    %v1315 = vunpack.c.l.b16 %v1046
    %v1316 = vunpack.c.h.b16 %v1046
    %v1317 = vunpack.c.l.b16 %v1047
    %v1318 = vunpack.c.h.b16 %v1047
    %v1319 = vunpack.c.l.b16 %v1048
    %v1320 = vunpack.c.h.b16 %v1048
    %v1321 = vunpack.c.l.b16 %v1049
    %v1322 = vunpack.c.h.b16 %v1049
    %v1323 = vunpack.c.l.b16 %v1050
    %v1324 = vunpack.c.h.b16 %v1050
    %v1325 = vunpack.c.l.b16 %v1051
    %v1326 = vunpack.c.h.b16 %v1051
    %v1327 = vunpack.c.l.b16 %v1052
    %v1328 = vunpack.c.h.b16 %v1052
    %v1329 = vunpack.c.l.b16 %v1053
    %v1330 = vunpack.c.h.b16 %v1053
    %v1331 = vunpack.c.l.b16 %v1054
    %v1332 = vunpack.c.h.b16 %v1054
    %v1333 = vunpack.c.l.b16 %v1055
    %v1334 = vunpack.c.h.b16 %v1055
    %v1335 = vunpack.c.l.b16 %v1056
    %v1336 = vunpack.c.h.b16 %v1056
    %v1337 = vunpack.c.l.b16 %v1057
    %v1338 = vunpack.c.h.b16 %v1057
    %v1339 = vunpack.c.l.b16 %v1058
    %v1340 = vunpack.c.h.b16 %v1058
    %v1341 = vunpack.c.l.b16 %v1059
    %v1342 = vunpack.c.h.b16 %v1059
    %v1343 = vunpack.c.l.b16 %v1060
    %v1344 = vunpack.c.h.b16 %v1060
    %v1345 = vunpack.c.l.b16 %v1061
    %v1346 = vunpack.c.h.b16 %v1061
    %v1347 = vunpack.c.l.b16 %v1062
    %v1348 = vunpack.c.h.b16 %v1062
    %v1349 = vunpack.c.l.b16 %v1063
    %v1350 = vunpack.c.h.b16 %v1063
    %v1351 = vunpack.c.l.b16 %v1064
    %v1352 = vunpack.c.h.b16 %v1064
    %v1353 = vunpack.c.l.b16 %v1065
    %v1354 = vunpack.c.h.b16 %v1065
    %v1355 = vunpack.c.l.b16 %v1066
    %v1356 = vunpack.c.h.b16 %v1066
    %v1357 = vunpack.c.l.b16 %v1067
    %v1358 = vunpack.c.h.b16 %v1067
    %v1359 = vunpack.c.l.b16 %v1068
    %v1360 = vunpack.c.h.b16 %v1068
    %v1361 = vunpack.c.l.b16 %v1069
    %v1362 = vunpack.c.h.b16 %v1069
    %v1363 = vunpack.c.l.b16 %v1070
    %v1364 = vunpack.c.h.b16 %v1070
    %v1365 = vunpack.c.l.b16 %v1071
    %v1366 = vunpack.c.h.b16 %v1071
    %v1367 = vunpack.c.l.b16 %v1072
    %v1368 = vunpack.c.h.b16 %v1072
    %v1369 = vunpack.c.l.b16 %v1073
    %v1370 = vunpack.c.h.b16 %v1073
    %v1371 = vunpack.c.l.b16 %v1074
    %v1372 = vunpack.c.h.b16 %v1074
    %v1373 = vunpack.c.l.b16 %v1075
    %v1374 = vunpack.c.h.b16 %v1075
    %v1375 = vunpack.c.l.b16 %v1076
    %v1376 = vunpack.c.h.b16 %v1076
    %v1377 = vunpack.c.l.b16 %v1077
    %v1378 = vunpack.c.h.b16 %v1077
    %v1379 = vunpack.c.l.b16 %v1078
    %v1380 = vunpack.c.h.b16 %v1078
    %v1381 = vunpack.c.l.b16 %v1079
    %v1382 = vunpack.c.h.b16 %v1079
    %v1383 = vunpack.c.l.b16 %v1080
    %v1384 = vunpack.c.h.b16 %v1080
    %v1385 = vunpack.c.l.b16 %v1081
    %v1386 = vunpack.c.h.b16 %v1081
    %v1387 = vunpack.c.l.b16 %v1082
    %v1388 = vunpack.c.h.b16 %v1082
    %v1389 = vunpack.c.l.b16 %v1083
    %v1390 = vunpack.c.h.b16 %v1083
    %v1391 = vunpack.c.l.b16 %v1084
    %v1392 = vunpack.c.h.b16 %v1084
    %v1393 = vunpack.c.l.b16 %v1085
    %v1394 = vunpack.c.h.b16 %v1085
    %v1395 = vunpack.c.l.b16 %v1086
    %v1396 = vunpack.c.h.b16 %v1086
    %v1397 = vunpack.c.l.b16 %v1087
    %v1398 = vunpack.c.h.b16 %v1087
    %v1399 = vunpack.c.l.b16 %v1088
    %v1400 = vunpack.c.h.b16 %v1088
    %v1401 = vunpack.c.l.b16 %v1089
    %v1402 = vunpack.c.h.b16 %v1089
    %v1403 = vunpack.c.l.b16 %v1090
    %v1404 = vunpack.c.h.b16 %v1090
    %v1405 = vunpack.c.l.b16 %v1091
    %v1406 = vunpack.c.h.b16 %v1091
    %v1407 = vunpack.c.l.b16 %v1092
    %v1408 = vunpack.c.h.b16 %v1092
    %v1409 = vunpack.c.l.b16 %v1093
    %v1410 = vunpack.c.h.b16 %v1093
    %v1411 = vunpack.c.l.b16 %v1094
    %v1412 = vunpack.c.h.b16 %v1094
    %v1413 = vunpack.c.l.b16 %v1095
    %v1414 = vunpack.c.h.b16 %v1095
    %v1415 = vunpack.c.l.b16 %v1096
    %v1416 = vunpack.c.h.b16 %v1096
    %v1417 = vunpack.c.l.b16 %v1097
    %v1418 = vunpack.c.h.b16 %v1097
    %v1419 = vunpack.c.l.b16 %v1098
    %v1420 = vunpack.c.h.b16 %v1098
    %v1421 = vunpack.c.l.b16 %v1099
    %v1422 = vunpack.c.h.b16 %v1099
    %v1423 = vunpack.c.l.b16 %v1100
    %v1424 = vunpack.c.h.b16 %v1100
    %v1425 = vunpack.c.l.b16 %v1101
    %v1426 = vunpack.c.h.b16 %v1101
    %v1427 = vunpack.c.l.b16 %v1102
    %v1428 = vunpack.c.h.b16 %v1102
    %v1429 = vunpack.c.l.b16 %v1103
    %v1430 = vunpack.c.h.b16 %v1103
    %v1431 = vunpack.c.l.b16 %v1104
    %v1432 = vunpack.c.h.b16 %v1104
    %v1433 = vunpack.c.l.b16 %v1105
    %v1434 = vunpack.c.h.b16 %v1105
    %v1435 = vunpack.c.l.b16 %v1106
    %v1436 = vunpack.c.h.b16 %v1106
    %v1437 = vunpack.c.l.b16 %v1107
    %v1438 = vunpack.c.h.b16 %v1107
    %v1439 = vunpack.c.l.b16 %v1108
    %v1440 = vunpack.c.h.b16 %v1108
    %v1441 = vunpack.c.l.b16 %v1109
    %v1442 = vunpack.c.h.b16 %v1109
    %v1443 = vunpack.c.l.b16 %v1110
    %v1444 = vunpack.c.h.b16 %v1110
    %v1445 = vunpack.c.l.b16 %v1111
    %v1446 = vunpack.c.h.b16 %v1111
    %v1447 = vunpack.c.l.b16 %v1112
    %v1448 = vunpack.c.h.b16 %v1112
    %v1449 = vunpack.c.l.b16 %v1113
    %v1450 = vunpack.c.h.b16 %v1113
    %v1451 = vunpack.c.l.b16 %v1114
    %v1452 = vunpack.c.h.b16 %v1114
    %v1453 = vunpack.c.l.b16 %v1115
    %v1454 = vunpack.c.h.b16 %v1115
    %v1455 = vunpack.c.l.b16 %v1116
    %v1456 = vunpack.c.h.b16 %v1116
    %v1457 = vunpack.c.l.b16 %v1117
    %v1458 = vunpack.c.h.b16 %v1117
    %v1459 = vunpack.c.l.b16 %v1118
    %v1460 = vunpack.c.h.b16 %v1118
    %v1461 = vunpack.c.l.b16 %v1119
    %v1462 = vunpack.c.h.b16 %v1119
    %v1463 = vunpack.c.l.b16 %v1120
    %v1464 = vunpack.c.h.b16 %v1120
    %v1465 = vunpack.c.l.b16 %v1121
    %v1466 = vunpack.c.h.b16 %v1121
    %v1467 = vunpack.c.l.b16 %v1122
    %v1468 = vunpack.c.h.b16 %v1122
    %v1469 = vunpack.c.l.b16 %v1123
    %v1470 = vunpack.c.h.b16 %v1123
    %v1471 = vunpack.c.l.b16 %v1124
    %v1472 = vunpack.c.h.b16 %v1124
    %v1473 = vunpack.c.l.b16 %v1125
    %v1474 = vunpack.c.h.b16 %v1125
    %v1475 = vunpack.c.l.b16 %v1126
    %v1476 = vunpack.c.h.b16 %v1126
    %v1477 = vunpack.c.l.b16 %v1127
    %v1478 = vunpack.c.h.b16 %v1127
    %v1479 = vunpack.c.l.b16 %v1128
    %v1480 = vunpack.c.h.b16 %v1128
    %v1481 = vunpack.c.l.b16 %v1129
    %v1482 = vunpack.c.h.b16 %v1129
    %v1483 = vunpack.c.l.b16 %v1130
    %v1484 = vunpack.c.h.b16 %v1130
    %v1485 = vunpack.c.l.b16 %v1131
    %v1486 = vunpack.c.h.b16 %v1131
    %v1487 = vunpack.c.l.b16 %v1132
    %v1488 = vunpack.c.h.b16 %v1132
    %v1489 = vunpack.c.l.b16 %v1133
    %v1490 = vunpack.c.h.b16 %v1133
    %v1491 = vunpack.c.l.b16 %v1134
    %v1492 = vunpack.c.h.b16 %v1134
    %v1493 = vunpack.c.l.b16 %v1135
    %v1494 = vunpack.c.h.b16 %v1135
    %v1495 = vunpack.c.l.b16 %v1136
    %v1496 = vunpack.c.h.b16 %v1136
    %v1497 = vunpack.c.l.b16 %v1137
    %v1498 = vunpack.c.h.b16 %v1137
    %v1499 = vunpack.c.l.b16 %v1138
    %v1500 = vunpack.c.h.b16 %v1138
    %v1501 = vunpack.c.l.b16 %v1139
    %v1502 = vunpack.c.h.b16 %v1139
    %v1503 = vunpack.c.l.b16 %v1140
    %v1504 = vunpack.c.h.b16 %v1140
    %v1505 = vunpack.c.l.b16 %v1141
    %v1506 = vunpack.c.h.b16 %v1141
    %v1507 = vunpack.c.l.b16 %v1142
    %v1508 = vunpack.c.h.b16 %v1142
    %v1509 = vunpack.c.l.b16 %v1143
    %v1510 = vunpack.c.h.b16 %v1143
    %v1511 = vunpack.c.l.b16 %v1144
    %v1512 = vunpack.c.h.b16 %v1144
    %v1513 = vunpack.c.l.b16 %v1145
    %v1514 = vunpack.c.h.b16 %v1145
    %v1515 = vunpack.c.l.b16 %v1146
    %v1516 = vunpack.c.h.b16 %v1146
    %v1517 = vunpack.c.l.b16 %v1147
    %v1518 = vunpack.c.h.b16 %v1147
    %v1519 = vunpack.c.l.b16 %v1148
    %v1520 = vunpack.c.h.b16 %v1148
    %v1521 = vunpack.c.l.b16 %v1149
    %v1522 = vunpack.c.h.b16 %v1149
    %v1523 = vunpack.c.l.b16 %v1150
    %v1524 = vunpack.c.h.b16 %v1150
    %v1525 = vunpack.c.l.b16 %v1151
    %v1526 = vunpack.c.h.b16 %v1151
    %v1527 = vunpack.c.l.b16 %v1152
    %v1528 = vunpack.c.h.b16 %v1152
    %v1529 = vunpack.c.l.b16 %v1153
    %v1530 = vunpack.c.h.b16 %v1153
    %v1531 = vunpack.c.l.b16 %v1154
    %v1532 = vunpack.c.h.b16 %v1154
    %v1533 = vunpack.c.l.b16 %v1155
    %v1534 = vunpack.c.h.b16 %v1155
    %v1535 = vunpack.c.l.b16 %v1156
    %v1536 = vunpack.c.h.b16 %v1156
    %v1537 = vunpack.c.l.b16 %v1157
    %v1538 = vunpack.c.h.b16 %v1157
    %v1539 = vunpack.c.l.b16 %v1158
    %v1540 = vunpack.c.h.b16 %v1158
    %v1541 = vunpack.c.l.b16 %v1159
    %v1542 = vunpack.c.h.b16 %v1159
    %v1543 = vunpack.c.l.b16 %v1160
    %v1544 = vunpack.c.h.b16 %v1160
    %v1545 = vpack.c.b16 %v1291, %v1289
    %v1546 = vpack.c.b16 %v1292, %v1290
    %v1547 = vpack.c.b16 %v1295, %v1293
    %v1548 = vpack.c.b16 %v1296, %v1294
    %v1549 = vpack.c.b16 %v1299, %v1297
    %v1550 = vpack.c.b16 %v1300, %v1298
    %v1551 = vpack.c.b16 %v1303, %v1301
    %v1552 = vpack.c.b16 %v1304, %v1302
    %v1553 = vpack.c.b16 %v1307, %v1305
    %v1554 = vpack.c.b16 %v1308, %v1306
    %v1555 = vpack.c.b16 %v1311, %v1309
    %v1556 = vpack.c.b16 %v1312, %v1310
    %v1557 = vpack.c.b16 %v1315, %v1313
    %v1558 = vpack.c.b16 %v1316, %v1314
    %v1559 = vpack.c.b16 %v1319, %v1317
    %v1560 = vpack.c.b16 %v1320, %v1318
    %v1561 = vpack.c.b16 %v1323, %v1321
    %v1562 = vpack.c.b16 %v1324, %v1322
    %v1563 = vpack.c.b16 %v1327, %v1325
    %v1564 = vpack.c.b16 %v1328, %v1326
    %v1565 = vpack.c.b16 %v1331, %v1329
    %v1566 = vpack.c.b16 %v1332, %v1330
    %v1567 = vpack.c.b16 %v1335, %v1333
    %v1568 = vpack.c.b16 %v1336, %v1334
    %v1569 = vpack.c.b16 %v1339, %v1337
    %v1570 = vpack.c.b16 %v1340, %v1338
    %v1571 = vpack.c.b16 %v1343, %v1341
    %v1572 = vpack.c.b16 %v1344, %v1342
    %v1573 = vpack.c.b16 %v1347, %v1345
    %v1574 = vpack.c.b16 %v1348, %v1346
    %v1575 = vpack.c.b16 %v1351, %v1349
    %v1576 = vpack.c.b16 %v1352, %v1350
    %v1577 = vpack.c.b16 %v1355, %v1353
    %v1578 = vpack.c.b16 %v1356, %v1354
    %v1579 = vpack.c.b16 %v1359, %v1357
    %v1580 = vpack.c.b16 %v1360, %v1358
    %v1581 = vpack.c.b16 %v1363, %v1361
    %v1582 = vpack.c.b16 %v1364, %v1362
    %v1583 = vpack.c.b16 %v1367, %v1365
    %v1584 = vpack.c.b16 %v1368, %v1366
    %v1585 = vpack.c.b16 %v1371, %v1369
    %v1586 = vpack.c.b16 %v1372, %v1370
    %v1587 = vpack.c.b16 %v1375, %v1373
    %v1588 = vpack.c.b16 %v1376, %v1374
    %v1589 = vpack.c.b16 %v1379, %v1377
    %v1590 = vpack.c.b16 %v1380, %v1378
    %v1591 = vpack.c.b16 %v1383, %v1381
    %v1592 = vpack.c.b16 %v1384, %v1382
    %v1593 = vpack.c.b16 %v1387, %v1385
    %v1594 = vpack.c.b16 %v1388, %v1386
    %v1595 = vpack.c.b16 %v1391, %v1389
    %v1596 = vpack.c.b16 %v1392, %v1390
    %v1597 = vpack.c.b16 %v1395, %v1393
    %v1598 = vpack.c.b16 %v1396, %v1394
    %v1599 = vpack.c.b16 %v1399, %v1397
    %v1600 = vpack.c.b16 %v1400, %v1398
    %v1601 = vpack.c.b16 %v1403, %v1401
    %v1602 = vpack.c.b16 %v1404, %v1402
    %v1603 = vpack.c.b16 %v1407, %v1405
    %v1604 = vpack.c.b16 %v1408, %v1406
    %v1605 = vpack.c.b16 %v1411, %v1409
    %v1606 = vpack.c.b16 %v1412, %v1410
    %v1607 = vpack.c.b16 %v1415, %v1413
    %v1608 = vpack.c.b16 %v1416, %v1414
    %v1609 = vpack.c.b16 %v1419, %v1417
    %v1610 = vpack.c.b16 %v1420, %v1418
    %v1611 = vpack.c.b16 %v1423, %v1421
    %v1612 = vpack.c.b16 %v1424, %v1422
    %v1613 = vpack.c.b16 %v1427, %v1425
    %v1614 = vpack.c.b16 %v1428, %v1426
    %v1615 = vpack.c.b16 %v1431, %v1429
    %v1616 = vpack.c.b16 %v1432, %v1430
    %v1617 = vpack.c.b16 %v1435, %v1433
    %v1618 = vpack.c.b16 %v1436, %v1434
    %v1619 = vpack.c.b16 %v1439, %v1437
    %v1620 = vpack.c.b16 %v1440, %v1438
    %v1621 = vpack.c.b16 %v1443, %v1441
    %v1622 = vpack.c.b16 %v1444, %v1442
    %v1623 = vpack.c.b16 %v1447, %v1445
    %v1624 = vpack.c.b16 %v1448, %v1446
    %v1625 = vpack.c.b16 %v1451, %v1449
    %v1626 = vpack.c.b16 %v1452, %v1450
    %v1627 = vpack.c.b16 %v1455, %v1453
    %v1628 = vpack.c.b16 %v1456, %v1454
    %v1629 = vpack.c.b16 %v1459, %v1457
    %v1630 = vpack.c.b16 %v1460, %v1458
    %v1631 = vpack.c.b16 %v1463, %v1461
    %v1632 = vpack.c.b16 %v1464, %v1462
    %v1633 = vpack.c.b16 %v1467, %v1465
    %v1634 = vpack.c.b16 %v1468, %v1466
    %v1635 = vpack.c.b16 %v1471, %v1469
    %v1636 = vpack.c.b16 %v1472, %v1470
    %v1637 = vpack.c.b16 %v1475, %v1473
    %v1638 = vpack.c.b16 %v1476, %v1474
    %v1639 = vpack.c.b16 %v1479, %v1477
    %v1640 = vpack.c.b16 %v1480, %v1478
    %v1641 = vpack.c.b16 %v1483, %v1481
    %v1642 = vpack.c.b16 %v1484, %v1482
    %v1643 = vpack.c.b16 %v1487, %v1485
    %v1644 = vpack.c.b16 %v1488, %v1486
    %v1645 = vpack.c.b16 %v1491, %v1489
    %v1646 = vpack.c.b16 %v1492, %v1490
    %v1647 = vpack.c.b16 %v1495, %v1493
    %v1648 = vpack.c.b16 %v1496, %v1494
    %v1649 = vpack.c.b16 %v1499, %v1497
    %v1650 = vpack.c.b16 %v1500, %v1498
    %v1651 = vpack.c.b16 %v1503, %v1501
    %v1652 = vpack.c.b16 %v1504, %v1502
    %v1653 = vpack.c.b16 %v1507, %v1505
    %v1654 = vpack.c.b16 %v1508, %v1506
    %v1655 = vpack.c.b16 %v1511, %v1509
    %v1656 = vpack.c.b16 %v1512, %v1510
    %v1657 = vpack.c.b16 %v1515, %v1513
    %v1658 = vpack.c.b16 %v1516, %v1514
    %v1659 = vpack.c.b16 %v1519, %v1517
    %v1660 = vpack.c.b16 %v1520, %v1518
    %v1661 = vpack.c.b16 %v1523, %v1521
    %v1662 = vpack.c.b16 %v1524, %v1522
    %v1663 = vpack.c.b16 %v1527, %v1525
    %v1664 = vpack.c.b16 %v1528, %v1526
    %v1665 = vpack.c.b16 %v1531, %v1529
    %v1666 = vpack.c.b16 %v1532, %v1530
    %v1667 = vpack.c.b16 %v1535, %v1533
    %v1668 = vpack.c.b16 %v1536, %v1534
    %v1669 = vpack.c.b16 %v1539, %v1537
    %v1670 = vpack.c.b16 %v1540, %v1538
    %v1671 = vpack.c.b16 %v1543, %v1541
    %v1672 = vpack.c.b16 %v1544, %v1542
    %1801 = vmatprep.subr.bf16.mxu0 %v1546
    %1802 = vmatpush1.bf16.msra.mxu0 %v1545
    %1803 = vmatprep.subr.bf16.mxu0 %v1548
    %1804 = vmatpush1.bf16.msra.mxu0 %v1547
    %1805 = vmatprep.subr.bf16.mxu0 %v1550
    %1806 = vmatpush1.bf16.msra.mxu0 %v1549
    %1807 = vmatprep.subr.bf16.mxu0 %v1552
    %1808 = vmatpush1.bf16.msra.mxu0 %v1551
    %1809 = vmatprep.subr.bf16.mxu0 %v1554
    %1810 = vmatpush1.bf16.msra.mxu0 %v1553
    %1811 = vmatprep.subr.bf16.mxu0 %v1556
    %1812 = vmatpush1.bf16.msra.mxu0 %v1555
    %1813 = vmatprep.subr.bf16.mxu0 %v1558
    %1814 = vmatpush1.bf16.msra.mxu0 %v1557
    %1815 = vmatprep.subr.bf16.mxu0 %v1560
    %1816 = vmatpush1.bf16.msra.mxu0 %v1559
    %1817 = vmatprep.subr.bf16.mxu0 %v1562
    %1818 = vmatpush1.bf16.msra.mxu0 %v1561
    %1819 = vmatprep.subr.bf16.mxu0 %v1564
    %1820 = vmatpush1.bf16.msra.mxu0 %v1563
    %1821 = vmatprep.subr.bf16.mxu0 %v1566
    %1822 = vmatpush1.bf16.msra.mxu0 %v1565
    %1823 = vmatprep.subr.bf16.mxu0 %v1568
    %1824 = vmatpush1.bf16.msra.mxu0 %v1567
    %1825 = vmatprep.subr.bf16.mxu0 %v1570
    %1826 = vmatpush1.bf16.msra.mxu0 %v1569
    %1827 = vmatprep.subr.bf16.mxu0 %v1572
    %1828 = vmatpush1.bf16.msra.mxu0 %v1571
    %1829 = vmatprep.subr.bf16.mxu0 %v1574
    %1830 = vmatpush1.bf16.msra.mxu0 %v1573
    %1831 = vmatprep.subr.bf16.mxu0 %v1576
    %1832 = vmatpush1.bf16.msra.mxu0 %v1575
    %1833 = vmatprep.mubr.bf16.mxu0 %v1026
    %1834 = vmatmul.mubr.bf16.gmra.mrb[0].mxu0 %v1025
    %v1835 = vpop.f32.mrb[0].mxu0
    %v1836 = vadd.f32 0.0, %v1835
    %v1837 = vpop.f32.mrb[0].mxu0
    %v1838 = vadd.f32 0.0, %v1837
    %v1839 = vpop.f32.mrb[0].mxu0
    %v1840 = vadd.f32 0.0, %v1839
    %v1841 = vpop.f32.mrb[0].mxu0
    %v1842 = vadd.f32 0.0, %v1841
    %1843 = vdwg.mxu0
    %1844 = vmatprep.subr.bf16.mxu0 %v1578
    %1845 = vmatpush1.bf16.msra.mxu0 %v1577
    %1846 = vmatprep.subr.bf16.mxu0 %v1580
    %1847 = vmatpush1.bf16.msra.mxu0 %v1579
    %1848 = vmatprep.subr.bf16.mxu0 %v1582
    %1849 = vmatpush1.bf16.msra.mxu0 %v1581
    %1850 = vmatprep.subr.bf16.mxu0 %v1584
    %1851 = vmatpush1.bf16.msra.mxu0 %v1583
    %1852 = vmatprep.subr.bf16.mxu0 %v1586
    %1853 = vmatpush1.bf16.msra.mxu0 %v1585
    %1854 = vmatprep.subr.bf16.mxu0 %v1588
    %1855 = vmatpush1.bf16.msra.mxu0 %v1587
    %1856 = vmatprep.subr.bf16.mxu0 %v1590
    %1857 = vmatpush1.bf16.msra.mxu0 %v1589
    %1858 = vmatprep.subr.bf16.mxu0 %v1592
    %1859 = vmatpush1.bf16.msra.mxu0 %v1591
    %1860 = vmatprep.subr.bf16.mxu0 %v1594
    %1861 = vmatpush1.bf16.msra.mxu0 %v1593
    %1862 = vmatprep.subr.bf16.mxu0 %v1596
    %1863 = vmatpush1.bf16.msra.mxu0 %v1595
    %1864 = vmatprep.subr.bf16.mxu0 %v1598
    %1865 = vmatpush1.bf16.msra.mxu0 %v1597
    %1866 = vmatprep.subr.bf16.mxu0 %v1600
    %1867 = vmatpush1.bf16.msra.mxu0 %v1599
    %1868 = vmatprep.subr.bf16.mxu0 %v1602
    %1869 = vmatpush1.bf16.msra.mxu0 %v1601
    %1870 = vmatprep.subr.bf16.mxu0 %v1604
    %1871 = vmatpush1.bf16.msra.mxu0 %v1603
    %1872 = vmatprep.subr.bf16.mxu0 %v1606
    %1873 = vmatpush1.bf16.msra.mxu0 %v1605
    %1874 = vmatprep.subr.bf16.mxu0 %v1608
    %1875 = vmatpush1.bf16.msra.mxu0 %v1607
    %1876 = vmatprep.mubr.bf16.mxu0 %v1028
    %1877 = vmatmul.mubr.bf16.gmra.mrb[0].mxu0 %v1027
    %v1878 = vpop.f32.mrb[0].mxu0
    %v1879 = vadd.f32 %v1836, %v1878
    %v1880 = vpop.f32.mrb[0].mxu0
    %v1881 = vadd.f32 %v1838, %v1880
    %v1882 = vpop.f32.mrb[0].mxu0
    %v1883 = vadd.f32 %v1840, %v1882
    %v1884 = vpop.f32.mrb[0].mxu0
    %v1885 = vadd.f32 %v1842, %v1884
    %1886 = vdwg.mxu0
    %1887 = vmatprep.subr.bf16.mxu0 %v1610
    %1888 = vmatpush1.bf16.msra.mxu0 %v1609
    %1889 = vmatprep.subr.bf16.mxu0 %v1612
    %1890 = vmatpush1.bf16.msra.mxu0 %v1611
    %1891 = vmatprep.subr.bf16.mxu0 %v1614
    %1892 = vmatpush1.bf16.msra.mxu0 %v1613
    %1893 = vmatprep.subr.bf16.mxu0 %v1616
    %1894 = vmatpush1.bf16.msra.mxu0 %v1615
    %1895 = vmatprep.subr.bf16.mxu0 %v1618
    %1896 = vmatpush1.bf16.msra.mxu0 %v1617
    %1897 = vmatprep.subr.bf16.mxu0 %v1620
    %1898 = vmatpush1.bf16.msra.mxu0 %v1619
    %1899 = vmatprep.subr.bf16.mxu0 %v1622
    %1900 = vmatpush1.bf16.msra.mxu0 %v1621
    %1901 = vmatprep.subr.bf16.mxu0 %v1624
    %1902 = vmatpush1.bf16.msra.mxu0 %v1623
    %1903 = vmatprep.subr.bf16.mxu0 %v1626
    %1904 = vmatpush1.bf16.msra.mxu0 %v1625
    %1905 = vmatprep.subr.bf16.mxu0 %v1628
    %1906 = vmatpush1.bf16.msra.mxu0 %v1627
    %1907 = vmatprep.subr.bf16.mxu0 %v1630
    %1908 = vmatpush1.bf16.msra.mxu0 %v1629
    %1909 = vmatprep.subr.bf16.mxu0 %v1632
    %1910 = vmatpush1.bf16.msra.mxu0 %v1631
    %1911 = vmatprep.subr.bf16.mxu0 %v1634
    %1912 = vmatpush1.bf16.msra.mxu0 %v1633
    %1913 = vmatprep.subr.bf16.mxu0 %v1636
    %1914 = vmatpush1.bf16.msra.mxu0 %v1635
    %1915 = vmatprep.subr.bf16.mxu0 %v1638
    %1916 = vmatpush1.bf16.msra.mxu0 %v1637
    %1917 = vmatprep.subr.bf16.mxu0 %v1640
    %1918 = vmatpush1.bf16.msra.mxu0 %v1639
    %1919 = vmatprep.mubr.bf16.mxu0 %v1030
    %1920 = vmatmul.mubr.bf16.gmra.mrb[0].mxu0 %v1029
    %v1921 = vpop.f32.mrb[0].mxu0
    %v1922 = vadd.f32 %v1879, %v1921
    %v1923 = vpop.f32.mrb[0].mxu0
    %v1924 = vadd.f32 %v1881, %v1923
    %v1925 = vpop.f32.mrb[0].mxu0
    %v1926 = vadd.f32 %v1883, %v1925
    %v1927 = vpop.f32.mrb[0].mxu0
    %v1928 = vadd.f32 %v1885, %v1927
    %1929 = vdwg.mxu0
    %1930 = vmatprep.subr.bf16.mxu0 %v1642
    %1931 = vmatpush1.bf16.msra.mxu0 %v1641
    %1932 = vmatprep.subr.bf16.mxu0 %v1644
    %1933 = vmatpush1.bf16.msra.mxu0 %v1643
    %1934 = vmatprep.subr.bf16.mxu0 %v1646
    %1935 = vmatpush1.bf16.msra.mxu0 %v1645
    %1936 = vmatprep.subr.bf16.mxu0 %v1648
    %1937 = vmatpush1.bf16.msra.mxu0 %v1647
    %1938 = vmatprep.subr.bf16.mxu0 %v1650
    %1939 = vmatpush1.bf16.msra.mxu0 %v1649
    %1940 = vmatprep.subr.bf16.mxu0 %v1652
    %1941 = vmatpush1.bf16.msra.mxu0 %v1651
    %1942 = vmatprep.subr.bf16.mxu0 %v1654
    %1943 = vmatpush1.bf16.msra.mxu0 %v1653
    %1944 = vmatprep.subr.bf16.mxu0 %v1656
    %1945 = vmatpush1.bf16.msra.mxu0 %v1655
    %1946 = vmatprep.subr.bf16.mxu0 %v1658
    %1947 = vmatpush1.bf16.msra.mxu0 %v1657
    %1948 = vmatprep.subr.bf16.mxu0 %v1660
    %1949 = vmatpush1.bf16.msra.mxu0 %v1659
    %1950 = vmatprep.subr.bf16.mxu0 %v1662
    %1951 = vmatpush1.bf16.msra.mxu0 %v1661
    %1952 = vmatprep.subr.bf16.mxu0 %v1664
    %1953 = vmatpush1.bf16.msra.mxu0 %v1663
    %1954 = vmatprep.subr.bf16.mxu0 %v1666
    %1955 = vmatpush1.bf16.msra.mxu0 %v1665
    %1956 = vmatprep.subr.bf16.mxu0 %v1668
    %1957 = vmatpush1.bf16.msra.mxu0 %v1667
    %1958 = vmatprep.subr.bf16.mxu0 %v1670
    %1959 = vmatpush1.bf16.msra.mxu0 %v1669
    %1960 = vmatprep.subr.bf16.mxu0 %v1672
    %1961 = vmatpush1.bf16.msra.mxu0 %v1671
    %1962 = vmatprep.mubr.bf16.mxu0 %v1032
    %1963 = vmatmul.mubr.bf16.gmra.mrb[0].mxu0 %v1031
    %v1964 = vpop.f32.mrb[0].mxu0
    %v1965 = vadd.f32 %v1922, %v1964
    %v1966 = vpop.f32.mrb[0].mxu0
    %v1967 = vadd.f32 %v1924, %v1966
    %v1968 = vpop.f32.mrb[0].mxu0
    %v1969 = vadd.f32 %v1926, %v1968
    %v1970 = vpop.f32.mrb[0].mxu0
    %v1971 = vadd.f32 %v1928, %v1970
    %1972 = vdwg.mxu0
    %v1973 = vadd.f32 %v21, %v1965
    %v1974 = vadd.f32 %v22, %v1967
    %v1975 = vadd.f32 %v23, %v1969
    %v1976 = vadd.f32 %v24, %v1971
    %v1977 = vld [vmem:[%s4] sm:$0x3]
    %v1979 = vlaneseq
    %v1980 = vshrl.u32 %v1979, 7
    %v1981 = vsub.s32 0, %v1980
    %v1982 = vrot.slane %v1977, %v1981
    %v1983 = vlaneseq
    %v1984 = vshrl.u32 %v1983, 7
    %v1985 = vsub.s32 1, %v1984
    %v1986 = vrot.slane %v1977, %v1985
    %v1989 = vadd.f32 %v1973, %v1982
    %v1990 = vadd.f32 %v1974, %v1986
    %v1991 = vadd.f32 %v1975, %v1982
    %v1992 = vadd.f32 %v1976, %v1986
    %1993 = vst [vmem:[#allocation2] sm:$0xff] %v1989
    %1994 = vst [vmem:[#allocation2 + $0x8] sm:$0xff] %v1990
    %1995 = vst [vmem:[#allocation2 + $0x10] sm:$0xff] %v1991
    %1996 = vst [vmem:[#allocation2 + $0x18] sm:$0xff] %v1992
    // Predicated region
    $region22: #{ffn_pallas.1} parent=1 // pred_check
      _
    $region23: #{ffn_pallas.1} parent=1 // pred_check_branch
      %1998 = sbr.rel (0) target = $region25
    $region24: #{ffn_pallas.1} parent=1 // pred_region
      %s2000 = ssub.s32 512, 512
      %2001 = vsyncadd [#allocation3], %s2000
      %s2002 = sshll.u32 [#allocation2], 4
      %s2003 = int_to_ptr.vmem [resolvable:$true] %s2002
      %2008 = dma.vmem_to_hbm [thread:$0]  %s2003, 512, %s5, [#allocation3], 256, 256, 16
    $region25: #{ffn_pallas.1} parent=1 // pred_fallthru
      _
    // Predicated region
    $region26: #{ffn_pallas.1} parent=1 // pred_check
      _
    $region27: #{ffn_pallas.1} parent=1 // pred_check_branch
      %2010 = sbr.rel (0) target = $region29
    $region28: #{ffn_pallas.1} parent=1 // pred_region
      %2011 = dma.done [#allocation3], 512
    $region29: #{ffn_pallas.1} parent=1 // pred_fallthru
      _
    %2012 = vsyncpa [#allocation3], 1

</llo_original>
